<compile_context>
chip_gen: v7x
topology: tpu7x:2x2x1
jax: 0.10.0
libtpu: 0.0.40
codegen_flags: <defaults>
</compile_context>

<pallas_src>
import functools

import jax
import jax.numpy as jnp
from jax import lax
from jax.experimental import pallas as pl
from jax.experimental.pallas import tpu as pltpu


def _round_up(v, m):
    return ((v + m - 1) // m) * m


def _pick_ctile(cout):
    """Output-channel tile: widest MXU-friendly width that divides Cout."""
    for t in (256, 128):
        if cout % t == 0:
            return t
    return cout                      # small/odd Cout: single full-channel tile


def _pick_row_tile(ho, wo, max_m=2048):
    """Largest divisor of Ho keeping the GEMM M = Ht*Wo under max_m."""
    best = 1
    for t in range(1, ho + 1):
        if ho % t == 0 and t * wo <= max_m:
            best = t
    return best


def _vmem_limit_bytes():
    # Derive the scoped-VMEM budget from the hardware (v7x: 64 MiB physical,
    # v5e/v6e: 128 MiB) instead of hard-coding; keep half as headroom.
    try:
        cap = getattr(pltpu.get_tpu_info(), "vmem_capacity_bytes",
                      64 * 1024 * 1024)
    except Exception:  # fall back on any query failure
        cap = 64 * 1024 * 1024
    return int(min(cap // 2, 64 * 1024 * 1024))


# ----------------------------------------------------------------------------
# Kernel 1: 3x3/stride-s conv + folded BN + ReLU
# ----------------------------------------------------------------------------
def _conv_bn_relu_kernel(x_ref, w_ref, b_ref, o_ref, *, stride, Ho, Wo, Ht):
    r = pl.program_id(1)
    row0 = r * Ht
    cin = x_ref.shape[-1]

    # Gather the 9 taps from the phase-decomposed padded input and concatenate
    # them along K -> one deep MXU contraction (K = 9*Cin) per tile.
    taps = []
    for ki in range(3):
        for kj in range(3):
            p = (ki % stride) * stride + (kj % stride)
            di, dj = ki // stride, kj // stride
            taps.append(x_ref[p, pl.ds(row0 + di, Ht), dj:dj + Wo, :])
    patches = jnp.concatenate(taps, axis=-1).reshape(Ht * Wo, 9 * cin)

    acc = jnp.dot(patches, w_ref[...], preferred_element_type=jnp.float32)
    acc = acc + b_ref[...]                       # folded BN bias
    acc = jnp.maximum(acc, 0.0)                  # ReLU
    o_ref[0] = acc.reshape(Ht, Wo, o_ref.shape[-1]).astype(o_ref.dtype)


def conv_bn_relu(x_ph, w, b, *, batch, stride, Ho, Wo):
    ss = stride * stride
    _, Hph, Wph, Cin = x_ph.shape
    K, Cout = w.shape
    Ht = _pick_row_tile(Ho, Wo)
    ctile = _pick_ctile(Cout)
    grid = (batch, Ho // Ht, Cout // ctile)

    kernel = functools.partial(_conv_bn_relu_kernel, stride=stride,
                               Ho=Ho, Wo=Wo, Ht=Ht)
    return pl.pallas_call(
        kernel,
        out_shape=jax.ShapeDtypeStruct((batch, Ho, Wo, Cout), jnp.bfloat16),
        grid=grid,
        in_specs=[
            # whole phase set of one image stays VMEM-resident across (r, j)
            pl.BlockSpec((ss, Hph, Wph, Cin), lambda n, r, j: (n, 0, 0, 0)),
            pl.BlockSpec((K, ctile), lambda n, r, j: (0, j)),
            pl.BlockSpec((1, ctile), lambda n, r, j: (0, j)),
        ],
        out_specs=pl.BlockSpec((1, Ht, Wo, ctile), lambda n, r, j: (n, r, 0, j)),
        compiler_params=pltpu.CompilerParams(
            dimension_semantics=("parallel", "parallel", "parallel"),
            vmem_limit_bytes=_vmem_limit_bytes()),
    )(x_ph, w, b.reshape(1, -1))


# ----------------------------------------------------------------------------
# Kernel 2: 3x3/stride-1 conv + folded BN + shortcut + residual add + ReLU
# ----------------------------------------------------------------------------
def _conv_bn_residual_kernel(*refs, Ho, Wo, Ht, identity):
    if identity:
        y_ref, w_ref, b_ref, xsc_ref, o_ref, pad_ref = refs
        wsc_ref = None
    else:
        y_ref, w_ref, b_ref, xsc_ref, wsc_ref, o_ref, pad_ref = refs

    r = pl.program_id(1)
    j = pl.program_id(2)
    c = y_ref.shape[-1]
    ctile = o_ref.shape[-1]
    m = Ht * Wo

    # Build the 1-pixel zero halo for this image once, in VMEM only (no padded
    # HBM intermediate, no double HBM store).
    @pl.when((r == 0) & (j == 0))
    def _build_halo():
        pad_ref[...] = jnp.zeros_like(pad_ref)
        pad_ref[1:Ho + 1, 1:Wo + 1, :] = y_ref[0]

    row0 = r * Ht
    taps = []
    for ki in range(3):
        row_blk = pad_ref[pl.ds(row0 + ki, Ht)]          # (Ht, Wo+2, c)
        for kj in range(3):
            taps.append(row_blk[:, kj:kj + Wo, :])
    patches = jnp.concatenate(taps, axis=-1).reshape(m, 9 * c)

    acc = jnp.dot(patches, w_ref[...], preferred_element_type=jnp.float32)
    acc = acc + b_ref[...]                               # bn2 (+ bn_sc) bias

    if identity:
        # Identity shortcut: direct f32 VPU add (no eye-embedded matmul).
        acc = acc + xsc_ref[0].reshape(m, ctile)
    else:
        # Projection shortcut: strided 1x1 conv fused as one more matmul.
        xs = xsc_ref[0, :, :Wo, :].reshape(m, xsc_ref.shape[-1])
        acc = acc + jnp.dot(xs, wsc_ref[...],
                            preferred_element_type=jnp.float32)

    acc = jnp.maximum(acc, 0.0)
    o_ref[0] = acc.reshape(Ht, Wo, ctile).astype(o_ref.dtype)


def conv_bn_residual(y, w2, bias, xsc, wsc, *, batch, stride, Ho, Wo, identity):
    _, _, _, Cmid = y.shape
    K2, Cout = w2.shape
    Ht = _pick_row_tile(Ho, Wo)
    ctile = _pick_ctile(Cout)
    grid = (batch, Ho // Ht, Cout // ctile)

    in_specs = [
        # conv1 output of one image, whole-image resident (halo source)
        pl.BlockSpec((1, Ho, Wo, Cmid), lambda n, r, j: (n, 0, 0, 0)),
        pl.BlockSpec((K2, ctile), lambda n, r, j: (0, j)),
        pl.BlockSpec((1, ctile), lambda n, r, j: (0, j)),
    ]
    args = [y, w2, bias.reshape(1, -1)]

    if identity:
        # f32 residual tile, row/cout tiled like the output block.
        in_specs.append(pl.BlockSpec((1, Ht, Wo, ctile),
                                     lambda n, r, j: (n, r, 0, j)))
        args.append(xsc)
    else:
        Cin = xsc.shape[-1]
        if stride == 1:
            # 1x1 stride-1 projection reads x directly, row tiled.
            in_specs.append(pl.BlockSpec((1, Ht, xsc.shape[2], Cin),
                                         lambda n, r, j: (n, r, 0, 0)))
        else:
            # strided 1x1 projection == centre phase of the padded input.
            ss = stride * stride
            p_sc = (1 % stride) * stride + (1 % stride)
            in_specs.append(pl.BlockSpec(
                (1, Ht, xsc.shape[2], Cin),
                lambda n, r, j: (n * ss + p_sc, r, 0, 0)))
        args.append(xsc)
        in_specs.append(pl.BlockSpec((Cin, ctile), lambda n, r, j: (0, j)))
        args.append(wsc)

    kernel = functools.partial(_conv_bn_residual_kernel, Ho=Ho, Wo=Wo, Ht=Ht,
                               identity=identity)
    return pl.pallas_call(
        kernel,
        out_shape=jax.ShapeDtypeStruct((batch, Ho, Wo, Cout), jnp.float32),
        grid=grid,
        in_specs=in_specs,
        out_specs=pl.BlockSpec((1, Ht, Wo, ctile), lambda n, r, j: (n, r, 0, j)),
        scratch_shapes=[pltpu.VMEM((Ho + 2, Wo + 2, Cmid), jnp.bfloat16)],
        compiler_params=pltpu.CompilerParams(
            # halo scratch is built at (r==0, j==0) and reused, so r/j run in
            # order on one core; the batch axis is megacore-parallel.
            dimension_semantics=("parallel", "arbitrary", "arbitrary"),
            vmem_limit_bytes=_vmem_limit_bytes()),
    )(*args)


# ----------------------------------------------------------------------------
# JAX glue: phase decomposition + BN folding (cheap, ~1x input traffic)
# ----------------------------------------------------------------------------
def _make_phases(x_nhwc, stride, pad=1):
    """Zero-pad spatially and split into stride x stride phases so every conv
    tap becomes a contiguous (rows, cols) slice inside the kernel."""
    N, H, W, C = x_nhwc.shape
    Hq = _round_up(H + 2 * pad, stride)
    Wq = _round_up(W + 2 * pad, stride)
    xp = jnp.pad(x_nhwc,
                 ((0, 0), (pad, Hq - H - pad), (pad, Wq - W - pad), (0, 0)))
    xp = xp.reshape(N, Hq // stride, stride, Wq // stride, stride, C)
    xp = jnp.transpose(xp, (0, 2, 4, 1, 3, 5))       # (N, pi, pj, a, b, C)
    return xp.reshape(N * stride * stride, Hq // stride, Wq // stride, C)


def _fold_conv_bn(w_oihw, bn, eps=1e-5):
    """(Cout,Cin,kh,kw) weight + eval-mode BN -> ((kh*kw*Cin, Cout) bf16 matrix
    with BN scale folded, (Cout,) f32 bias).  K ordering matches the kernels'
    tap concatenation: k = (ki*kw + kj)*Cin + c."""
    gamma, beta, mean, var = bn
    scale = gamma / jnp.sqrt(var + eps)
    bias = beta - mean * scale
    cout, cin, kh, kw = w_oihw.shape
    wm = jnp.transpose(w_oihw, (2, 3, 1, 0)).reshape(kh * kw * cin, cout)
    wm = wm * scale[None, :]
    return wm.astype(jnp.bfloat16), bias.astype(jnp.float32)


@functools.partial(jax.jit, static_argnames=("stride",))
def basic_block_forward(x_nchw, params, stride):
    """x_nchw: (N, Cin, H, W) f32 -> (N, Cout, Ho, Wo) f32 (NCHW)."""
    N, Cin, H, W = x_nchw.shape
    Cout = params["w1"].shape[0]
    Ho = (H - 1) // stride + 1
    Wo = (W - 1) // stride + 1

    x_nhwc = jnp.transpose(x_nchw, (0, 2, 3, 1))
    x_bf = x_nhwc.astype(jnp.bfloat16)
    x_ph = _make_phases(x_bf, stride)          # (N*s*s, Hph, Wph, Cin) bf16

    # conv1 (3x3, stride) + bn1 + relu -> (N, Ho, Wo, Cout) bf16
    w1, b1 = _fold_conv_bn(params["w1"], params["bn1"])
    out1 = conv_bn_relu(x_ph, w1, b1, batch=N, stride=stride, Ho=Ho, Wo=Wo)

    # conv2 (3x3, stride 1) + bn2 + shortcut + residual add + relu, one kernel
    w2, b2 = _fold_conv_bn(params["w2"], params["bn2"])
    identity = (stride == 1) and (Cin == Cout)
    if identity:
        xsc, wsc, bias2 = x_nhwc, None, b2               # f32 residual add
    else:
        wsc, bsc = _fold_conv_bn(params["w_sc"], params["bn_sc"])
        bias2 = b2 + bsc
        xsc = x_bf if stride == 1 else x_ph              # 1x1 projection input
    out2 = conv_bn_residual(out1, w2, bias2, xsc, wsc, batch=N, stride=stride,
                            Ho=Ho, Wo=Wo, identity=identity)

    # TODO(synk): a fused consumer could take NHWC directly and skip this
    # layout transpose back to the module's NCHW convention.
    return jnp.transpose(out2, (0, 3, 1, 2))


# ----------------------------------------------------------------------------
# Pure-JAX reference (lax.conv, f32) for correctness check
# ----------------------------------------------------------------------------
def _bn_ref(x_nchw, gamma, beta, mean, var, eps=1e-5):
    sh = (1, -1, 1, 1)
    return (x_nchw - mean.reshape(sh)) / jnp.sqrt(var.reshape(sh) + eps) \
        * gamma.reshape(sh) + beta.reshape(sh)


def _conv_ref(x_nchw, w, stride, pad):
    return lax.conv_general_dilated(
        x_nchw, w, (stride, stride), ((pad, pad), (pad, pad)),
        dimension_numbers=("NCHW", "OIHW", "NCHW"))


def basic_block_ref(x, params, stride):
    out = jax.nn.relu(_bn_ref(_conv_ref(x, params["w1"], stride, 1),
                              *params["bn1"]))
    out = _bn_ref(_conv_ref(out, params["w2"], 1, 1), *params["bn2"])
    Cin, Cout = x.shape[1], params["w1"].shape[0]
    if stride != 1 or Cin != Cout:
        sc = _bn_ref(_conv_ref(x, params["w_sc"], stride, 0), *params["bn_sc"])
    else:
        sc = x
    return jax.nn.relu(out + sc)


# ----------------------------------------------------------------------------
# Deterministic parameter construction
# ----------------------------------------------------------------------------
def make_params(key, in_planes, planes, stride, w_scale=0.1):
    ks = jax.random.split(key, 6)

    def bn(k):
        k1, k2, k3, k4 = jax.random.split(k, 4)
        gamma = jax.random.uniform(k1, (planes,), jnp.float32, 0.5, 1.5)
        beta = 0.1 * jax.random.normal(k2, (planes,), jnp.float32)
        mean = 0.1 * jax.random.normal(k3, (planes,), jnp.float32)
        var = jax.random.uniform(k4, (planes,), jnp.float32, 0.5, 1.5)
        return (gamma, beta, mean, var)

    params = {
        "w1": w_scale * jax.random.normal(ks[0], (planes, in_planes, 3, 3),
                                          jnp.float32),
        "bn1": bn(ks[1]),
        "w2": w_scale * jax.random.normal(ks[2], (planes, planes, 3, 3),
                                          jnp.float32),
        "bn2": bn(ks[3]),
    }
    if stride != 1 or in_planes != planes:
        params["w_sc"] = w_scale * jax.random.normal(
            ks[4], (planes, in_planes, 1, 1), jnp.float32)
        params["bn_sc"] = bn(ks[5])
    return params


if __name__ == "__main__":
    key = jax.random.PRNGKey(0)
    kx, kxc, kxd, kp1, kp2, kp3, kp4 = jax.random.split(key, 7)

    def check(x, params, stride, expect_shape, tag, atol=3e-2, rtol=3e-2):
        out = jax.block_until_ready(
            basic_block_forward(x, params, stride=stride))
        ref = basic_block_ref(x, params, stride)
        assert out.shape == expect_shape, (tag, out.shape)
        err = float(jnp.max(jnp.abs(out - ref)))
        assert jnp.allclose(out, ref, atol=atol, rtol=rtol), \
            f"{tag}: max abs err {err}"

    x = jax.random.normal(kx, (2, 4, 16, 16), jnp.float32)

    # A: projection shortcut, stride 2, 4 -> 8 channels
    check(x, make_params(kp1, 4, 8, 2), 2, (2, 8, 8, 8), "proj/s2")
    # B: identity shortcut, stride 1, 4 -> 4 channels
    check(x, make_params(kp2, 4, 4, 1), 1, (2, 4, 16, 16), "identity")
    # C: stride-1 projection + multiple output-row tiles (64x64 input)
    xc = jax.random.normal(kxc, (2, 4, 64, 64), jnp.float32)
    check(xc, make_params(kp3, 4, 8, 1), 1, (2, 8, 64, 64), "proj/s1/rows")
    # D: wide channels -> exercises the 256-wide output-channel tiling
    xd = jax.random.normal(kxd, (1, 8, 8, 8), jnp.float32)
    check(xd, make_params(kp4, 8, 512, 1, w_scale=0.02), 1, (1, 512, 8, 8),
          "proj/s1/ctile")

    print("KERNEL_OK")
</pallas_src>

<mosaic_0001>
module attributes {stable_mosaic.version = 11 : i64} {
  func.func @_conv_bn_relu_kernel(%arg0: i32, %arg1: i32, %arg2: i32, %arg3: memref<4x9x9x4xbf16, #tpu.memory_space<vmem>>, %arg4: memref<36x8xbf16, #tpu.memory_space<vmem>>, %arg5: memref<1x8xf32, #tpu.memory_space<vmem>>, %arg6: memref<1x8x8x8xbf16, #tpu.memory_space<vmem>>) attributes {dimension_semantics = [#tpu.dimension_semantics<parallel>, #tpu.dimension_semantics<parallel>, #tpu.dimension_semantics<parallel>], iteration_bounds = array<i64: 2, 1, 1>, scalar_prefetch = 0 : i64, scratch_operands = 0 : i64, tpu.core_type = #tpu.core_type<tc>, window_params = [{transform_indices = @transform_0, window_bounds = array<i64: 4, 9, 9, 4>}, {transform_indices = @transform_1, window_bounds = array<i64: 36, 8>}, {transform_indices = @transform_2, window_bounds = array<i64: 1, 8>}, {transform_indices = @transform_3, window_bounds = array<i64: 1, 8, 8, 8>}]} {
    %c8_i32 = arith.constant 8 : i32
    %0 = arith.muli %arg1, %c8_i32 : i32
    %c0_i32 = arith.constant 0 : i32
    %1 = arith.addi %0, %c0_i32 : i32
    %c0 = arith.constant 0 : index
    %2 = arith.index_cast %1 : i32 to index
    %c0_0 = arith.constant 0 : index
    %c0_1 = arith.constant 0 : index
    %3 = vector.load %arg3[%c0, %2, %c0_0, %c0_1] : memref<4x9x9x4xbf16, #tpu.memory_space<vmem>>, vector<1x8x8x4xbf16>
    %4 = vector.shape_cast %3 : vector<1x8x8x4xbf16> to vector<8x8x4xbf16>
    %c0_i32_2 = arith.constant 0 : i32
    %5 = arith.addi %0, %c0_i32_2 : i32
    %c1 = arith.constant 1 : index
    %6 = arith.index_cast %5 : i32 to index
    %c0_3 = arith.constant 0 : index
    %c0_4 = arith.constant 0 : index
    %7 = vector.load %arg3[%c1, %6, %c0_3, %c0_4] : memref<4x9x9x4xbf16, #tpu.memory_space<vmem>>, vector<1x8x8x4xbf16>
    %8 = vector.shape_cast %7 : vector<1x8x8x4xbf16> to vector<8x8x4xbf16>
    %c0_i32_5 = arith.constant 0 : i32
    %9 = arith.addi %0, %c0_i32_5 : i32
    %c0_6 = arith.constant 0 : index
    %10 = arith.index_cast %9 : i32 to index
    %c1_7 = arith.constant 1 : index
    %c0_8 = arith.constant 0 : index
    %11 = vector.load %arg3[%c0_6, %10, %c1_7, %c0_8] : memref<4x9x9x4xbf16, #tpu.memory_space<vmem>>, vector<1x8x8x4xbf16>
    %12 = vector.shape_cast %11 : vector<1x8x8x4xbf16> to vector<8x8x4xbf16>
    %c0_i32_9 = arith.constant 0 : i32
    %13 = arith.addi %0, %c0_i32_9 : i32
    %c2 = arith.constant 2 : index
    %14 = arith.index_cast %13 : i32 to index
    %c0_10 = arith.constant 0 : index
    %c0_11 = arith.constant 0 : index
    %15 = vector.load %arg3[%c2, %14, %c0_10, %c0_11] : memref<4x9x9x4xbf16, #tpu.memory_space<vmem>>, vector<1x8x8x4xbf16>
    %16 = vector.shape_cast %15 : vector<1x8x8x4xbf16> to vector<8x8x4xbf16>
    %c0_i32_12 = arith.constant 0 : i32
    %17 = arith.addi %0, %c0_i32_12 : i32
    %c3 = arith.constant 3 : index
    %18 = arith.index_cast %17 : i32 to index
    %c0_13 = arith.constant 0 : index
    %c0_14 = arith.constant 0 : index
    %19 = vector.load %arg3[%c3, %18, %c0_13, %c0_14] : memref<4x9x9x4xbf16, #tpu.memory_space<vmem>>, vector<1x8x8x4xbf16>
    %20 = vector.shape_cast %19 : vector<1x8x8x4xbf16> to vector<8x8x4xbf16>
    %c0_i32_15 = arith.constant 0 : i32
    %21 = arith.addi %0, %c0_i32_15 : i32
    %c2_16 = arith.constant 2 : index
    %22 = arith.index_cast %21 : i32 to index
    %c1_17 = arith.constant 1 : index
    %c0_18 = arith.constant 0 : index
    %23 = vector.load %arg3[%c2_16, %22, %c1_17, %c0_18] : memref<4x9x9x4xbf16, #tpu.memory_space<vmem>>, vector<1x8x8x4xbf16>
    %24 = vector.shape_cast %23 : vector<1x8x8x4xbf16> to vector<8x8x4xbf16>
    %c1_i32 = arith.constant 1 : i32
    %25 = arith.addi %0, %c1_i32 : i32
    %c0_19 = arith.constant 0 : index
    %26 = arith.index_cast %25 : i32 to index
    %c0_20 = arith.constant 0 : index
    %c0_21 = arith.constant 0 : index
    %27 = vector.load %arg3[%c0_19, %26, %c0_20, %c0_21] : memref<4x9x9x4xbf16, #tpu.memory_space<vmem>>, vector<1x8x8x4xbf16>
    %28 = vector.shape_cast %27 : vector<1x8x8x4xbf16> to vector<8x8x4xbf16>
    %c1_i32_22 = arith.constant 1 : i32
    %29 = arith.addi %0, %c1_i32_22 : i32
    %c1_23 = arith.constant 1 : index
    %30 = arith.index_cast %29 : i32 to index
    %c0_24 = arith.constant 0 : index
    %c0_25 = arith.constant 0 : index
    %31 = vector.load %arg3[%c1_23, %30, %c0_24, %c0_25] : memref<4x9x9x4xbf16, #tpu.memory_space<vmem>>, vector<1x8x8x4xbf16>
    %32 = vector.shape_cast %31 : vector<1x8x8x4xbf16> to vector<8x8x4xbf16>
    %c1_i32_26 = arith.constant 1 : i32
    %33 = arith.addi %0, %c1_i32_26 : i32
    %c0_27 = arith.constant 0 : index
    %34 = arith.index_cast %33 : i32 to index
    %c1_28 = arith.constant 1 : index
    %c0_29 = arith.constant 0 : index
    %35 = vector.load %arg3[%c0_27, %34, %c1_28, %c0_29] : memref<4x9x9x4xbf16, #tpu.memory_space<vmem>>, vector<1x8x8x4xbf16>
    %36 = vector.shape_cast %35 : vector<1x8x8x4xbf16> to vector<8x8x4xbf16>
    %37 = tpu.concatenate %4, %8, %12, %16, %20, %24, %28, %32, %36 in 2 : vector<8x8x4xbf16>, vector<8x8x4xbf16>, vector<8x8x4xbf16>, vector<8x8x4xbf16>, vector<8x8x4xbf16>, vector<8x8x4xbf16>, vector<8x8x4xbf16>, vector<8x8x4xbf16>, vector<8x8x4xbf16> -> vector<8x8x36xbf16>
    %38 = vector.shape_cast %37 : vector<8x8x36xbf16> to vector<64x36xbf16>
    %c0_30 = arith.constant 0 : index
    %c0_31 = arith.constant 0 : index
    %39 = vector.load %arg4[%c0_30, %c0_31] : memref<36x8xbf16, #tpu.memory_space<vmem>>, vector<36x8xbf16>
    %cst = arith.constant dense<0.000000e+00> : vector<64x8xf32>
    %40 = tpu.matmul %38, %39, %cst {dimension_numbers = #tpu.dot_dimension_numbers<[1], [0], [0], [1], [0, 0, 1, 1], [], []>} : vector<64x36xbf16>, vector<36x8xbf16>, vector<64x8xf32> -> vector<64x8xf32>
    %c0_32 = arith.constant 0 : index
    %c0_33 = arith.constant 0 : index
    %41 = vector.load %arg5[%c0_32, %c0_33] : memref<1x8xf32, #tpu.memory_space<vmem>>, vector<1x8xf32>
    %42 = vector.broadcast %41 : vector<1x8xf32> to vector<64x8xf32>
    %43 = arith.addf %40, %42 : vector<64x8xf32>
    %cst_34 = arith.constant 0.000000e+00 : f32
    %44 = vector.broadcast %cst_34 : f32 to vector<64x8xf32>
    %45 = arith.maximumf %43, %44 : vector<64x8xf32>
    %46 = vector.shape_cast %45 : vector<64x8xf32> to vector<8x8x8xf32>
    %47 = arith.truncf %46 : vector<8x8x8xf32> to vector<8x8x8xbf16>
    %c0_35 = arith.constant 0 : index
    %c0_36 = arith.constant 0 : index
    %c0_37 = arith.constant 0 : index
    %c0_38 = arith.constant 0 : index
    %48 = vector.load %arg6[%c0_35, %c0_36, %c0_37, %c0_38] : memref<1x8x8x8xbf16, #tpu.memory_space<vmem>>, vector<1x8x8x8xbf16>
    %49 = vector.shape_cast %48 : vector<1x8x8x8xbf16> to vector<8x8x8xbf16>
    %50 = vector.shape_cast %47 : vector<8x8x8xbf16> to vector<1x8x8x8xbf16>
    tpu.vector_store %arg6[%c0_35, %c0_36, %c0_37, %c0_38], %50 {strides = array<i32>} : memref<1x8x8x8xbf16, #tpu.memory_space<vmem>>, vector<1x8x8x8xbf16>,
    return
  }
  func.func @transform_0(%arg0: i32, %arg1: i32, %arg2: i32) -> (i32, i32, i32, i32) {
    %c0_i32 = arith.constant 0 : i32
    %c0_i32_0 = arith.constant 0 : i32
    %c0_i32_1 = arith.constant 0 : i32
    %c0_i32_2 = arith.constant 0 : i32
    return %arg0, %c0_i32, %c0_i32_0, %c0_i32_1 : i32, i32, i32, i32
  }
  func.func @transform_1(%arg0: i32, %arg1: i32, %arg2: i32) -> (i32, i32) {
    %c0_i32 = arith.constant 0 : i32
    %c0_i32_0 = arith.constant 0 : i32
    return %c0_i32, %arg2 : i32, i32
  }
  func.func @transform_2(%arg0: i32, %arg1: i32, %arg2: i32) -> (i32, i32) {
    %c0_i32 = arith.constant 0 : i32
    %c0_i32_0 = arith.constant 0 : i32
    return %c0_i32, %arg2 : i32, i32
  }
  func.func @transform_3(%arg0: i32, %arg1: i32, %arg2: i32) -> (i32, i32, i32, i32) {
    %c0_i32 = arith.constant 0 : i32
    %c0_i32_0 = arith.constant 0 : i32
    return %arg0, %arg1, %c0_i32, %arg2 : i32, i32, i32, i32
  }
}

module attributes {stable_mosaic.version = 11 : i64} {
  func.func @_conv_bn_residual_kernel(%arg0: i32, %arg1: i32, %arg2: i32, %arg3: memref<1x8x8x8xbf16, #tpu.memory_space<vmem>>, %arg4: memref<72x8xbf16, #tpu.memory_space<vmem>>, %arg5: memref<1x8xf32, #tpu.memory_space<vmem>>, %arg6: memref<1x8x9x4xbf16, #tpu.memory_space<vmem>>, %arg7: memref<4x8xbf16, #tpu.memory_space<vmem>>, %arg8: memref<1x8x8x8xf32, #tpu.memory_space<vmem>>, %arg9: memref<10x10x8xbf16, #tpu.memory_space<vmem>>) attributes {dimension_semantics = [#tpu.dimension_semantics<parallel>, #tpu.dimension_semantics<arbitrary>, #tpu.dimension_semantics<arbitrary>], iteration_bounds = array<i64: 2, 1, 1>, scalar_prefetch = 0 : i64, scratch_operands = 1 : i64, tpu.core_type = #tpu.core_type<tc>, window_params = [{transform_indices = @transform_0, window_bounds = array<i64: 1, 8, 8, 8>}, {transform_indices = @transform_1, window_bounds = array<i64: 72, 8>}, {transform_indices = @transform_2, window_bounds = array<i64: 1, 8>}, {transform_indices = @transform_3, window_bounds = array<i64: 1, 8, 9, 4>}, {transform_indices = @transform_4, window_bounds = array<i64: 4, 8>}, {transform_indices = @transform_5, window_bounds = array<i64: 1, 8, 8, 8>}]} {
    %c0_i32 = arith.constant 0 : i32
    %0 = arith.cmpi eq, %arg1, %c0_i32 : i32
    %c0_i32_0 = arith.constant 0 : i32
    %1 = arith.cmpi eq, %arg2, %c0_i32_0 : i32
    %2 = arith.andi %0, %1 : i1
    %3 = arith.extui %2 : i1 to i32
    %c0_i32_1 = arith.constant 0 : i32
    %4 = arith.cmpi ne, %3, %c0_i32_1 : i32
    scf.if %4 {
      %cst_24 = arith.constant 0.000000e+00 : bf16
      %43 = vector.broadcast %cst_24 : bf16 to vector<10x10x8xbf16>
      %c0_25 = arith.constant 0 : index
      %c0_26 = arith.constant 0 : index
      %c0_27 = arith.constant 0 : index
      %44 = vector.load %arg9[%c0_25, %c0_26, %c0_27] : memref<10x10x8xbf16, #tpu.memory_space<vmem>>, vector<10x10x8xbf16>
      tpu.vector_store %arg9[%c0_25, %c0_26, %c0_27], %43 {strides = array<i32>} : memref<10x10x8xbf16, #tpu.memory_space<vmem>>, vector<10x10x8xbf16>,
      %c0_28 = arith.constant 0 : index
      %c0_29 = arith.constant 0 : index
      %c0_30 = arith.constant 0 : index
      %c0_31 = arith.constant 0 : index
      %45 = vector.load %arg3[%c0_28, %c0_29, %c0_30, %c0_31] : memref<1x8x8x8xbf16, #tpu.memory_space<vmem>>, vector<1x8x8x8xbf16>
      %46 = vector.shape_cast %45 : vector<1x8x8x8xbf16> to vector<8x8x8xbf16>
      %c1 = arith.constant 1 : index
      %c1_32 = arith.constant 1 : index
      %c0_33 = arith.constant 0 : index
      %47 = vector.load %arg9[%c1, %c1_32, %c0_33] : memref<10x10x8xbf16, #tpu.memory_space<vmem>>, vector<8x8x8xbf16>
      tpu.vector_store %arg9[%c1, %c1_32, %c0_33], %46 {strides = array<i32>} : memref<10x10x8xbf16, #tpu.memory_space<vmem>>, vector<8x8x8xbf16>,
    } else {
    }
    %c8_i32 = arith.constant 8 : i32
    %5 = arith.muli %arg1, %c8_i32 : i32
    %c0_i32_2 = arith.constant 0 : i32
    %6 = arith.addi %5, %c0_i32_2 : i32
    %7 = arith.index_cast %6 : i32 to index
    %c0 = arith.constant 0 : index
    %c0_3 = arith.constant 0 : index
    %8 = vector.load %arg9[%7, %c0, %c0_3] : memref<10x10x8xbf16, #tpu.memory_space<vmem>>, vector<8x10x8xbf16>
    %9 = vector.extract_strided_slice %8 {offsets = [0, 0, 0], sizes = [8, 8, 8], strides = [1, 1, 1]} : vector<8x10x8xbf16> to vector<8x8x8xbf16>
    %10 = vector.extract_strided_slice %8 {offsets = [0, 1, 0], sizes = [8, 8, 8], strides = [1, 1, 1]} : vector<8x10x8xbf16> to vector<8x8x8xbf16>
    %11 = vector.extract_strided_slice %8 {offsets = [0, 2, 0], sizes = [8, 8, 8], strides = [1, 1, 1]} : vector<8x10x8xbf16> to vector<8x8x8xbf16>
    %c1_i32 = arith.constant 1 : i32
    %12 = arith.addi %5, %c1_i32 : i32
    %13 = arith.index_cast %12 : i32 to index
    %c0_4 = arith.constant 0 : index
    %c0_5 = arith.constant 0 : index
    %14 = vector.load %arg9[%13, %c0_4, %c0_5] : memref<10x10x8xbf16, #tpu.memory_space<vmem>>, vector<8x10x8xbf16>
    %15 = vector.extract_strided_slice %14 {offsets = [0, 0, 0], sizes = [8, 8, 8], strides = [1, 1, 1]} : vector<8x10x8xbf16> to vector<8x8x8xbf16>
    %16 = vector.extract_strided_slice %14 {offsets = [0, 1, 0], sizes = [8, 8, 8], strides = [1, 1, 1]} : vector<8x10x8xbf16> to vector<8x8x8xbf16>
    %17 = vector.extract_strided_slice %14 {offsets = [0, 2, 0], sizes = [8, 8, 8], strides = [1, 1, 1]} : vector<8x10x8xbf16> to vector<8x8x8xbf16>
    %c2_i32 = arith.constant 2 : i32
    %18 = arith.addi %5, %c2_i32 : i32
    %19 = arith.index_cast %18 : i32 to index
    %c0_6 = arith.constant 0 : index
    %c0_7 = arith.constant 0 : index
    %20 = vector.load %arg9[%19, %c0_6, %c0_7] : memref<10x10x8xbf16, #tpu.memory_space<vmem>>, vector<8x10x8xbf16>
    %21 = vector.extract_strided_slice %20 {offsets = [0, 0, 0], sizes = [8, 8, 8], strides = [1, 1, 1]} : vector<8x10x8xbf16> to vector<8x8x8xbf16>
    %22 = vector.extract_strided_slice %20 {offsets = [0, 1, 0], sizes = [8, 8, 8], strides = [1, 1, 1]} : vector<8x10x8xbf16> to vector<8x8x8xbf16>
    %23 = vector.extract_strided_slice %20 {offsets = [0, 2, 0], sizes = [8, 8, 8], strides = [1, 1, 1]} : vector<8x10x8xbf16> to vector<8x8x8xbf16>
    %24 = tpu.concatenate %9, %10, %11, %15, %16, %17, %21, %22, %23 in 2 : vector<8x8x8xbf16>, vector<8x8x8xbf16>, vector<8x8x8xbf16>, vector<8x8x8xbf16>, vector<8x8x8xbf16>, vector<8x8x8xbf16>, vector<8x8x8xbf16>, vector<8x8x8xbf16>, vector<8x8x8xbf16> -> vector<8x8x72xbf16>
    %25 = vector.shape_cast %24 : vector<8x8x72xbf16> to vector<64x72xbf16>
    %c0_8 = arith.constant 0 : index
    %c0_9 = arith.constant 0 : index
    %26 = vector.load %arg4[%c0_8, %c0_9] : memref<72x8xbf16, #tpu.memory_space<vmem>>, vector<72x8xbf16>
    %cst = arith.constant dense<0.000000e+00> : vector<64x8xf32>
    %27 = tpu.matmul %25, %26, %cst {dimension_numbers = #tpu.dot_dimension_numbers<[1], [0], [0], [1], [0, 0, 1, 1], [], []>} : vector<64x72xbf16>, vector<72x8xbf16>, vector<64x8xf32> -> vector<64x8xf32>
    %c0_10 = arith.constant 0 : index
    %c0_11 = arith.constant 0 : index
    %28 = vector.load %arg5[%c0_10, %c0_11] : memref<1x8xf32, #tpu.memory_space<vmem>>, vector<1x8xf32>
    %29 = vector.broadcast %28 : vector<1x8xf32> to vector<64x8xf32>
    %30 = arith.addf %27, %29 : vector<64x8xf32>
    %c0_12 = arith.constant 0 : index
    %c0_13 = arith.constant 0 : index
    %c0_14 = arith.constant 0 : index
    %c0_15 = arith.constant 0 : index
    %31 = vector.load %arg6[%c0_12, %c0_13, %c0_14, %c0_15] : memref<1x8x9x4xbf16, #tpu.memory_space<vmem>>, vector<1x8x8x4xbf16>
    %32 = vector.shape_cast %31 : vector<1x8x8x4xbf16> to vector<8x8x4xbf16>
    %33 = vector.shape_cast %32 : vector<8x8x4xbf16> to vector<64x4xbf16>
    %c0_16 = arith.constant 0 : index
    %c0_17 = arith.constant 0 : index
    %34 = vector.load %arg7[%c0_16, %c0_17] : memref<4x8xbf16, #tpu.memory_space<vmem>>, vector<4x8xbf16>
    %cst_18 = arith.constant dense<0.000000e+00> : vector<64x8xf32>
    %35 = tpu.matmul %33, %34, %cst_18 {dimension_numbers = #tpu.dot_dimension_numbers<[1], [0], [0], [1], [0, 0, 1, 1], [], []>} : vector<64x4xbf16>, vector<4x8xbf16>, vector<64x8xf32> -> vector<64x8xf32>
    %36 = arith.addf %30, %35 : vector<64x8xf32>
    %cst_19 = arith.constant 0.000000e+00 : f32
    %37 = vector.broadcast %cst_19 : f32 to vector<64x8xf32>
    %38 = arith.maximumf %36, %37 : vector<64x8xf32>
    %39 = vector.shape_cast %38 : vector<64x8xf32> to vector<8x8x8xf32>
    %c0_20 = arith.constant 0 : index
    %c0_21 = arith.constant 0 : index
    %c0_22 = arith.constant 0 : index
    %c0_23 = arith.constant 0 : index
    %40 = vector.load %arg8[%c0_20, %c0_21, %c0_22, %c0_23] : memref<1x8x8x8xf32, #tpu.memory_space<vmem>>, vector<1x8x8x8xf32>
    %41 = vector.shape_cast %40 : vector<1x8x8x8xf32> to vector<8x8x8xf32>
    %42 = vector.shape_cast %39 : vector<8x8x8xf32> to vector<1x8x8x8xf32>
    tpu.vector_store %arg8[%c0_20, %c0_21, %c0_22, %c0_23], %42 {strides = array<i32>} : memref<1x8x8x8xf32, #tpu.memory_space<vmem>>, vector<1x8x8x8xf32>,
    return
  }
  func.func @transform_0(%arg0: i32, %arg1: i32, %arg2: i32) -> (i32, i32, i32, i32) {
    %c0_i32 = arith.constant 0 : i32
    %c0_i32_0 = arith.constant 0 : i32
    %c0_i32_1 = arith.constant 0 : i32
    %c0_i32_2 = arith.constant 0 : i32
    return %arg0, %c0_i32, %c0_i32_0, %c0_i32_1 : i32, i32, i32, i32
  }
  func.func @transform_1(%arg0: i32, %arg1: i32, %arg2: i32) -> (i32, i32) {
    %c0_i32 = arith.constant 0 : i32
    %c0_i32_0 = arith.constant 0 : i32
    return %c0_i32, %arg2 : i32, i32
  }
  func.func @transform_2(%arg0: i32, %arg1: i32, %arg2: i32) -> (i32, i32) {
    %c0_i32 = arith.constant 0 : i32
    %c0_i32_0 = arith.constant 0 : i32
    return %c0_i32, %arg2 : i32, i32
  }
  func.func @transform_3(%arg0: i32, %arg1: i32, %arg2: i32) -> (i32, i32, i32, i32) {
    %c4_i32 = arith.constant 4 : i32
    %0 = arith.muli %arg0, %c4_i32 : i32
    %c3_i32 = arith.constant 3 : i32
    %1 = arith.addi %0, %c3_i32 : i32
    %c0_i32 = arith.constant 0 : i32
    %c0_i32_0 = arith.constant 0 : i32
    %c0_i32_1 = arith.constant 0 : i32
    return %1, %arg1, %c0_i32, %c0_i32_0 : i32, i32, i32, i32
  }
  func.func @transform_4(%arg0: i32, %arg1: i32, %arg2: i32) -> (i32, i32) {
    %c0_i32 = arith.constant 0 : i32
    %c0_i32_0 = arith.constant 0 : i32
    return %c0_i32, %arg2 : i32, i32
  }
  func.func @transform_5(%arg0: i32, %arg1: i32, %arg2: i32) -> (i32, i32, i32, i32) {
    %c0_i32 = arith.constant 0 : i32
    %c0_i32_0 = arith.constant 0 : i32
    return %arg0, %arg1, %c0_i32, %arg2 : i32, i32, i32, i32
  }
}

</mosaic_0001>

<llo_original>
// kernel: basic_block_forward.2
$region0: #{basic_block_forward.2}
  #allocation0 [shape = 'u32[]', space=smem, size = 0x4, offset = 0x4, fixed_abs, tag = 'smem constant byte address 0x4 - core index']
  #allocation1 [shape = 'u32[144,128]{1,0:T(1,128)}', space=vmem, size = 0x12000, scoped, tag = 'internal scratch']
  %s0 = inlined_call_operand.vmem [shape: bf16[8,9,9,4], index: 0, kind: input, shape index: {}]
  %s1 = inlined_call_operand.vmem [shape: bf16[36,8], index: 1, kind: input, shape index: {}]
  %s2 = inlined_call_operand.vmem [shape: f32[1,8], index: 2, kind: input, shape index: {}]
  %s3 = inlined_call_operand.vmem [shape: bf16[2,8,8,8], index: 3, kind: output, shape index: {}]
  %s4 = sld [smem:[#allocation0]]
  $region45: #{basic_block_forward.2} parent=0
    _
  %s6 = ssub.s32 1, %s4
  %s7 = scalar_select 0, %s6, %s4
  loop: start=0, step=1, limit=4
  $region2: #{basic_block_forward.2} parent=0 // loop_pre_header
    _
  $region3: #{basic_block_forward.2} parent=0 // loop_header
    %s9 = sphi 0, %s13
    %p10 = scmp.ge.s32.totalorder %s9, 4
    %s16 = sphi 0, %s35
    %s17 = sphi 0, %s31
    %s18 = sphi 0, %s27
    %s19 = sphi 0, %s16
    %s20 = sphi 0, %s17
    %s21 = sphi 0, %s18
    %s22 = sphi 0, %s19
    %s23 = sphi 0, %s20
    %s24 = sphi 0, %s21
    %s38 = sphi 0, %s40
    %s41 = sphi 0, %s38
    %s42 = sphi 0, %s41
    %s58 = sphi 0, %s42
    %s64 = sphi 0, %s66
    %s67 = sphi 0, %s64
    %s68 = sphi 0, %s67
    %s84 = sphi 0, %s68
    %s90 = sphi 0, %s92
    %s93 = sphi 0, %s90
    %s94 = sphi 0, %s93
    %s110 = sphi 0, %s94
    %s120 = sphi 0, %s122
    %s123 = sphi 0, %s120
    %s124 = sphi 0, %s123
    %s140 = sphi 0, %s124
  $region4: #{basic_block_forward.2} parent=0 // loop_header_branch
    %12 = sbr.rel (%p10) target = $region8
  $region5: #{basic_block_forward.2} parent=0 // loop_body
    %s14 = ssub.s32 %s9, 1
    %s15 = ssub.s32 %s9, 2
    %s25 = sadd.s32 1, %s18
    %p26 = scmp.ge.s32.totalorder %s25, 1
    %s27 = scalar_select %p26, 0, %s25
    %s28 = sadd.s32 1, %s17
    %s29 = scalar_select %p26, %s28, %s17
    %p30 = scmp.ge.s32.totalorder %s29, 1
    %s31 = scalar_select %p30, 0, %s29
    %s32 = sadd.s32 1, %s16
    %s33 = scalar_select %p30, %s32, %s16
    %p34 = scmp.ge.s32.totalorder %s33, 2
    %s35 = scalar_select %p34, 0, %s33
    %s36 = ssub.s32 %s16, %s35
    %p37 = scmp.eq.s32.totalorder %s36, 0
    %s39 = sadd.s32 %s38, 1
    %s40 = scalar_select %p37, %s38, %s39
    %p43 = pneg %p37
    %p44 = scmp.eq.s32.totalorder %s9, 1
    %p45 = por %p43, %p44
    %p46 = scmp.ne.s32.totalorder %s38, %s41
    %p47 = scmp.eq.s32.totalorder %s9, 0
    %p48 = por %p46, %p47
    %p49 = scmp.ne.s32.totalorder %s38, %s41
    %p50 = scmp.eq.s32.totalorder %s14, 1
    %p51 = por %p49, %p50
    %p52 = scmp.ne.s32.totalorder %s41, %s42
    %p53 = scmp.eq.s32.totalorder %s14, 0
    %p54 = por %p52, %p53
    %p55 = scmp.ne.s32.totalorder %s41, %s42
    %p56 = scmp.eq.s32.totalorder %s15, 1
    %p57 = por %p55, %p56
    %p59 = scmp.ne.s32.totalorder %s42, %s58
    %p60 = scmp.eq.s32.totalorder %s15, 0
    %p61 = por %p59, %p60
    %s62 = ssub.s32 %s18, %s27
    %p63 = scmp.eq.s32.totalorder %s62, 0
    %s65 = sadd.s32 %s64, 1
    %s66 = scalar_select %p63, %s64, %s65
    %p69 = pneg %p63
    %p70 = scmp.eq.s32.totalorder %s9, 1
    %p71 = por %p69, %p70
    %p72 = scmp.ne.s32.totalorder %s64, %s67
    %p73 = scmp.eq.s32.totalorder %s9, 0
    %p74 = por %p72, %p73
    %p75 = scmp.ne.s32.totalorder %s64, %s67
    %p76 = scmp.eq.s32.totalorder %s14, 1
    %p77 = por %p75, %p76
    %p78 = scmp.ne.s32.totalorder %s67, %s68
    %p79 = scmp.eq.s32.totalorder %s14, 0
    %p80 = por %p78, %p79
    %p81 = scmp.ne.s32.totalorder %s67, %s68
    %p82 = scmp.eq.s32.totalorder %s15, 1
    %p83 = por %p81, %p82
    %p85 = scmp.ne.s32.totalorder %s68, %s84
    %p86 = scmp.eq.s32.totalorder %s15, 0
    %p87 = por %p85, %p86
    %s88 = ssub.s32 %s18, %s27
    %p89 = scmp.eq.s32.totalorder %s88, 0
    %s91 = sadd.s32 %s90, 1
    %s92 = scalar_select %p89, %s90, %s91
    %p95 = pneg %p89
    %p96 = scmp.eq.s32.totalorder %s9, 1
    %p97 = por %p95, %p96
    %p98 = scmp.ne.s32.totalorder %s90, %s93
    %p99 = scmp.eq.s32.totalorder %s9, 0
    %p100 = por %p98, %p99
    %p101 = scmp.ne.s32.totalorder %s90, %s93
    %p102 = scmp.eq.s32.totalorder %s14, 1
    %p103 = por %p101, %p102
    %p104 = scmp.ne.s32.totalorder %s93, %s94
    %p105 = scmp.eq.s32.totalorder %s14, 0
    %p106 = por %p104, %p105
    %p107 = scmp.ne.s32.totalorder %s93, %s94
    %p108 = scmp.eq.s32.totalorder %s15, 1
    %p109 = por %p107, %p108
    %p111 = scmp.ne.s32.totalorder %s94, %s110
    %p112 = scmp.eq.s32.totalorder %s15, 0
    %p113 = por %p111, %p112
    %s114 = ssub.s32 %s16, %s35
    %s115 = ssub.s32 %s17, %s31
    %s116 = sor.u32 %s114, %s115
    %s117 = ssub.s32 %s18, %s27
    %s118 = sor.u32 %s116, %s117
    %p119 = scmp.eq.s32.totalorder %s118, 0
    %s121 = sadd.s32 %s120, 1
    %s122 = scalar_select %p119, %s120, %s121
    %p125 = pneg %p119
    %p126 = scmp.eq.s32.totalorder %s9, 1
    %p127 = por %p125, %p126
    %p128 = scmp.ne.s32.totalorder %s120, %s123
    %p129 = scmp.eq.s32.totalorder %s9, 0
    %p130 = por %p128, %p129
    %p131 = scmp.ne.s32.totalorder %s120, %s123
    %p132 = scmp.eq.s32.totalorder %s14, 1
    %p133 = por %p131, %p132
    %p134 = scmp.ne.s32.totalorder %s123, %s124
    %p135 = scmp.eq.s32.totalorder %s14, 0
    %p136 = por %p134, %p135
    %p137 = scmp.ne.s32.totalorder %s123, %s124
    %p138 = scmp.eq.s32.totalorder %s15, 1
    %p139 = por %p137, %p138
    %p141 = scmp.ne.s32.totalorder %s124, %s140
    %p142 = scmp.eq.s32.totalorder %s15, 0
    %p143 = por %p141, %p142
    %p144 = scmp.le.s32.totalorder 1, %s9
    %p145 = scmp.lt.s32.totalorder %s9, 3
    %p146 = pnand %p144, %p145
    %p147 = pneg %p146
    // Predicated region
    $region9: #{basic_block_forward.2} parent=5 // pred_check
      _
    $region10: #{basic_block_forward.2} parent=5 // pred_check_branch
      %149 = sbr.rel (%p146) target = $region12
    $region11: #{basic_block_forward.2} parent=5 // pred_region
      %s150 = ssub.s32 %s9, 1
      // Predicated region
      $region13: #{basic_block_forward.2} parent=11 // pred_check
        %p151 = pneg %p80
      $region14: #{basic_block_forward.2} parent=11 // pred_check_branch
        %153 = sbr.rel (%p151) target = $region16
      $region15: #{basic_block_forward.2} parent=11 // pred_region
        %p154 = scmp.lt.s32.totalorder %s21, 0
        %s155 = scalar_select %p154, %s21, 0
        %s156 = smul.addr %s155, 4
        %s157 = scalar_lea.vmem %s1, %s156
      $region16: #{basic_block_forward.2} parent=11 // pred_fallthru
        _
      // Predicated region
      $region17: #{basic_block_forward.2} parent=11 // pred_check
        %p158 = pneg %p106
      $region18: #{basic_block_forward.2} parent=11 // pred_check_branch
        %160 = sbr.rel (%p158) target = $region20
      $region19: #{basic_block_forward.2} parent=11 // pred_region
        %p161 = scmp.lt.s32.totalorder %s21, 0
        %s162 = scalar_select %p161, %s21, 0
        %s163 = scalar_lea.vmem %s2, %s162
      $region20: #{basic_block_forward.2} parent=11 // pred_fallthru
        _
    $region12: #{basic_block_forward.2} parent=5 // pred_fallthru
      _
    %p164 = scmp.lt.s32.totalorder %s9, 2
    // Predicated region
    $region21: #{basic_block_forward.2} parent=5 // pred_check
      %p165 = pneg %p164
    $region22: #{basic_block_forward.2} parent=5 // pred_check_branch
      %167 = sbr.rel (%p165) target = $region24
    $region23: #{basic_block_forward.2} parent=5 // pred_region
      // Predicated region
      $region25: #{basic_block_forward.2} parent=23 // pred_check
        %p168 = pneg %p48
      $region26: #{basic_block_forward.2} parent=23 // pred_check_branch
        %170 = sbr.rel (%p168) target = $region28
      $region27: #{basic_block_forward.2} parent=23 // pred_region
        %s171 = smul.u32 4, %s16
        %p172 = scmp.lt.s32.totalorder %s171, 7
        %s173 = scalar_select %p172, %s171, 7
        %s174 = smul.addr %s173, 18
        %s175 = smul.addr %s174, 4
        %s176 = scalar_lea.vmem %s0, %s175
        %s177 = smul.u32 4, %s16
      $region28: #{basic_block_forward.2} parent=23 // pred_fallthru
        _
    $region24: #{basic_block_forward.2} parent=5 // pred_fallthru
      _
    %p178 = scmp.le.s32.totalorder 1, %s9
    %p179 = scmp.lt.s32.totalorder %s9, 3
    %p180 = pnand %p178, %p179
    %p181 = pneg %p180
    // Predicated region
    $region29: #{basic_block_forward.2} parent=5 // pred_check
      _
    $region30: #{basic_block_forward.2} parent=5 // pred_check_branch
      %183 = sbr.rel (%p180) target = $region32
    $region31: #{basic_block_forward.2} parent=5 // pred_region
      %s184 = ssub.s32 %s9, 1
      %s185 = smul.u32 4, %s19
      %p186 = scmp.lt.s32.totalorder %s185, 7
      %s187 = scalar_select %p186, %s185, 7
      %s188 = smul.addr %s187, 18
      %s189 = smul.addr %s188, 4
      %s190 = scalar_lea.vmem %s0, %s189
      %p191 = pneg %p54
      %p192 = pneg %p51
      %p193 = scmp.lt.s32.totalorder %s21, 0
      %s194 = scalar_select %p193, %s21, 0
      %s195 = smul.addr %s194, 4
      %s196 = scalar_lea.vmem %s1, %s195
      %p197 = pneg %p80
      %p198 = pneg %p77
      %p199 = scmp.lt.s32.totalorder %s21, 0
      %s200 = scalar_select %p199, %s21, 0
      %s201 = scalar_lea.vmem %s2, %s200
      %p202 = pneg %p106
      %p203 = pneg %p103
      %p204 = pneg %p136
      %p205 = pneg %p133
      %s206 = smul.u32 8, %s20
      %p207 = scmp.lt.s32.totalorder %s19, 1
      %s208 = scalar_select %p207, %s19, 1
      %p209 = scmp.lt.s32.totalorder %s206, 7
      %s210 = scalar_select %p209, %s206, 7
      %p211 = scmp.lt.s32.totalorder %s21, 0
      %s212 = scalar_select %p211, %s21, 0
      %s213 = sadd.s32 %s212, %s210
      %s214 = smul.addr %s208, 8
      %s215 = sadd.s32 %s213, %s214
      %s216 = smul.addr %s215, 4
      %s217 = scalar_lea.vmem %s3, %s216
      %s218 = smul.u32 4, %s19
      %p219 = scmp.lt.s32.totalorder %s218, 7
      %s220 = scalar_select %p219, %s218, 7
      %s221 = smul.addr %s220, 18
      %s222 = smul.addr %s221, 4
      %s223 = scalar_lea.vmem %s0, %s222
      %s224 = smul.u32 4, %s19
      %p225 = scmp.lt.s32.totalorder %s21, 0
      %s226 = scalar_select %p225, %s21, 0
      %s227 = smul.addr %s226, 4
      %s228 = scalar_lea.vmem %s1, %s227
      %p229 = scmp.lt.s32.totalorder %s21, 0
      %s230 = scalar_select %p229, %s21, 0
      %s231 = scalar_lea.vmem %s2, %s230
      %s232 = smul.u32 8, %s20
      %p233 = scmp.lt.s32.totalorder %s19, 1
      %s234 = scalar_select %p233, %s19, 1
      %p235 = scmp.lt.s32.totalorder %s232, 7
      %s236 = scalar_select %p235, %s232, 7
      %p237 = scmp.lt.s32.totalorder %s21, 0
      %s238 = scalar_select %p237, %s21, 0
      %s239 = sadd.s32 %s238, %s236
      %s240 = smul.addr %s234, 8
      %s241 = sadd.s32 %s239, %s240
      %s242 = smul.addr %s241, 4
      %s243 = scalar_lea.vmem %s3, %s242
      %s244 = smul.u32 8, %s20
      %s246 = smul.u32 %s20, 8
      %s247 = smul.u32 %s246, 2
      %s248 = smul.addr %s247, 4
      %s249 = scalar_lea.vmem %s223, %s248
      %v250 = vld [vmem:[%s249] sm:$0xf]
      %v251 = vld [vmem:[%s249 + $0x8] sm:$0xf]
      %v252 = vld [vmem:[%s249 + $0x10] sm:$0xf]
      %v253 = vld [vmem:[%s249 + $0x18] sm:$0xf]
      %v254 = vld [vmem:[%s249 + $0x20] sm:$0xf]
      %v255 = vld [vmem:[%s249 + $0x28] sm:$0xf]
      %v256 = vld [vmem:[%s249 + $0x30] sm:$0xf]
      %v257 = vld [vmem:[%s249 + $0x38] sm:$0xf]
      %s258 = sadd.s32 %s247, 18
      %s259 = smul.addr %s258, 4
      %s260 = scalar_lea.vmem %s223, %s259
      %v261 = vld [vmem:[%s260] sm:$0xf]
      %v262 = vld [vmem:[%s260 + $0x8] sm:$0xf]
      %v263 = vld [vmem:[%s260 + $0x10] sm:$0xf]
      %v264 = vld [vmem:[%s260 + $0x18] sm:$0xf]
      %v265 = vld [vmem:[%s260 + $0x20] sm:$0xf]
      %v266 = vld [vmem:[%s260 + $0x28] sm:$0xf]
      %v267 = vld [vmem:[%s260 + $0x30] sm:$0xf]
      %v268 = vld [vmem:[%s260 + $0x38] sm:$0xf]
      %v269 = vld [vmem:[%s249 + $0x4] sm:$0x1]
      %v270 = vld [vmem:[%s249 + $0xc] sm:$0x1]
      %v271 = vld [vmem:[%s249 + $0x14] sm:$0x1]
      %v272 = vld [vmem:[%s249 + $0x1c] sm:$0x1]
      %v273 = vld [vmem:[%s249 + $0x24] sm:$0x1]
      %v274 = vld [vmem:[%s249 + $0x2c] sm:$0x1]
      %v275 = vld [vmem:[%s249 + $0x34] sm:$0x1]
      %v276 = vld [vmem:[%s249 + $0x3c] sm:$0x1]
      %s277 = sadd.s32 %s247, 36
      %s278 = smul.addr %s277, 4
      %s279 = scalar_lea.vmem %s223, %s278
      %v280 = vld [vmem:[%s279] sm:$0xf]
      %v281 = vld [vmem:[%s279 + $0x8] sm:$0xf]
      %v282 = vld [vmem:[%s279 + $0x10] sm:$0xf]
      %v283 = vld [vmem:[%s279 + $0x18] sm:$0xf]
      %v284 = vld [vmem:[%s279 + $0x20] sm:$0xf]
      %v285 = vld [vmem:[%s279 + $0x28] sm:$0xf]
      %v286 = vld [vmem:[%s279 + $0x30] sm:$0xf]
      %v287 = vld [vmem:[%s279 + $0x38] sm:$0xf]
      %s288 = sadd.s32 %s247, 54
      %s289 = smul.addr %s288, 4
      %s290 = scalar_lea.vmem %s223, %s289
      %v291 = vld [vmem:[%s290] sm:$0xf]
      %v292 = vld [vmem:[%s290 + $0x8] sm:$0xf]
      %v293 = vld [vmem:[%s290 + $0x10] sm:$0xf]
      %v294 = vld [vmem:[%s290 + $0x18] sm:$0xf]
      %v295 = vld [vmem:[%s290 + $0x20] sm:$0xf]
      %v296 = vld [vmem:[%s290 + $0x28] sm:$0xf]
      %v297 = vld [vmem:[%s290 + $0x30] sm:$0xf]
      %v298 = vld [vmem:[%s290 + $0x38] sm:$0xf]
      %v299 = vld [vmem:[%s279 + $0x4] sm:$0x1]
      %v300 = vld [vmem:[%s279 + $0xc] sm:$0x1]
      %v301 = vld [vmem:[%s279 + $0x14] sm:$0x1]
      %v302 = vld [vmem:[%s279 + $0x1c] sm:$0x1]
      %v303 = vld [vmem:[%s279 + $0x24] sm:$0x1]
      %v304 = vld [vmem:[%s279 + $0x2c] sm:$0x1]
      %v305 = vld [vmem:[%s279 + $0x34] sm:$0x1]
      %v306 = vld [vmem:[%s279 + $0x3c] sm:$0x1]
      %s307 = sadd.s32 %s246, 1
      %s308 = smul.u32 %s307, 2
      %s309 = smul.addr %s308, 4
      %s310 = scalar_lea.vmem %s223, %s309
      %v311 = vld [vmem:[%s310] sm:$0xf]
      %v312 = vld [vmem:[%s310 + $0x8] sm:$0xf]
      %v313 = vld [vmem:[%s310 + $0x10] sm:$0xf]
      %v314 = vld [vmem:[%s310 + $0x18] sm:$0xf]
      %v315 = vld [vmem:[%s310 + $0x20] sm:$0xf]
      %v316 = vld [vmem:[%s310 + $0x28] sm:$0xf]
      %v317 = vld [vmem:[%s310 + $0x30] sm:$0xf]
      %v318 = vld [vmem:[%s310 + $0x38] sm:$0xf]
      %s319 = sadd.s32 %s308, 18
      %s320 = smul.addr %s319, 4
      %s321 = scalar_lea.vmem %s223, %s320
      %v322 = vld [vmem:[%s321] sm:$0xf]
      %v323 = vld [vmem:[%s321 + $0x8] sm:$0xf]
      %v324 = vld [vmem:[%s321 + $0x10] sm:$0xf]
      %v325 = vld [vmem:[%s321 + $0x18] sm:$0xf]
      %v326 = vld [vmem:[%s321 + $0x20] sm:$0xf]
      %v327 = vld [vmem:[%s321 + $0x28] sm:$0xf]
      %v328 = vld [vmem:[%s321 + $0x30] sm:$0xf]
      %v329 = vld [vmem:[%s321 + $0x38] sm:$0xf]
      %v330 = vld [vmem:[%s310 + $0x4] sm:$0x1]
      %v331 = vld [vmem:[%s310 + $0xc] sm:$0x1]
      %v332 = vld [vmem:[%s310 + $0x14] sm:$0x1]
      %v333 = vld [vmem:[%s310 + $0x1c] sm:$0x1]
      %v334 = vld [vmem:[%s310 + $0x24] sm:$0x1]
      %v335 = vld [vmem:[%s310 + $0x2c] sm:$0x1]
      %v336 = vld [vmem:[%s310 + $0x34] sm:$0x1]
      %v337 = vld [vmem:[%s310 + $0x3c] sm:$0x1]
      %v346 = vunpack.c.l.b16 %v261
      %v347 = vunpack.c.l.b16 %v262
      %v348 = vunpack.c.l.b16 %v263
      %v349 = vunpack.c.l.b16 %v264
      %v350 = vunpack.c.l.b16 %v265
      %v351 = vunpack.c.l.b16 %v266
      %v352 = vunpack.c.l.b16 %v267
      %v353 = vunpack.c.l.b16 %v268
      %v354 = vpack.c.b16 %v346, %v346
      %v355 = vpack.c.b16 %v347, %v347
      %v356 = vpack.c.b16 %v348, %v348
      %v357 = vpack.c.b16 %v349, %v349
      %v358 = vpack.c.b16 %v350, %v350
      %v359 = vpack.c.b16 %v351, %v351
      %v360 = vpack.c.b16 %v352, %v352
      %v361 = vpack.c.b16 %v353, %v353
      %362 = vrot.lane.b32.xlu0 %v354, 4
      %v363 = vpop.permute.xlu0 %362
      %364 = vrot.lane.b32.xlu0 %v355, 4
      %v365 = vpop.permute.xlu0 %364
      %366 = vrot.lane.b32.xlu0 %v356, 4
      %v367 = vpop.permute.xlu0 %366
      %368 = vrot.lane.b32.xlu0 %v357, 4
      %v369 = vpop.permute.xlu0 %368
      %370 = vrot.lane.b32.xlu0 %v358, 4
      %v371 = vpop.permute.xlu0 %370
      %372 = vrot.lane.b32.xlu0 %v359, 4
      %v373 = vpop.permute.xlu0 %372
      %374 = vrot.lane.b32.xlu0 %v360, 4
      %v375 = vpop.permute.xlu0 %374
      %376 = vrot.lane.b32.xlu0 %v361, 4
      %v377 = vpop.permute.xlu0 %376
      %v394 = vunpack.c.l.b16 %v250
      %v395 = vunpack.c.l.b16 %v269
      %v396 = vunpack.c.l.b16 %v251
      %v397 = vunpack.c.l.b16 %v270
      %v398 = vunpack.c.l.b16 %v252
      %v399 = vunpack.c.l.b16 %v271
      %v400 = vunpack.c.l.b16 %v253
      %v401 = vunpack.c.l.b16 %v272
      %v402 = vunpack.c.l.b16 %v254
      %v403 = vunpack.c.l.b16 %v273
      %v404 = vunpack.c.l.b16 %v255
      %v405 = vunpack.c.l.b16 %v274
      %v406 = vunpack.c.l.b16 %v256
      %v407 = vunpack.c.l.b16 %v275
      %v408 = vunpack.c.l.b16 %v257
      %v409 = vunpack.c.l.b16 %v276
      %v410 = vpack.c.b16 %v395, %v394
      %v411 = vpack.c.b16 %v397, %v396
      %v412 = vpack.c.b16 %v399, %v398
      %v413 = vpack.c.b16 %v401, %v400
      %v414 = vpack.c.b16 %v403, %v402
      %v415 = vpack.c.b16 %v405, %v404
      %v416 = vpack.c.b16 %v407, %v406
      %v417 = vpack.c.b16 %v409, %v408
      %v419 = vshrl.u32 %v410, 16
      %v421 = vshll.u32 %v410, 16
      %v423 = vrot.slane %v421, 1
      %v424 = vor.u32 %v419, %v423
      %v426 = vshrl.u32 %v411, 16
      %v428 = vshll.u32 %v411, 16
      %v430 = vrot.slane %v428, 1
      %v431 = vor.u32 %v426, %v430
      %v433 = vshrl.u32 %v412, 16
      %v435 = vshll.u32 %v412, 16
      %v437 = vrot.slane %v435, 1
      %v438 = vor.u32 %v433, %v437
      %v440 = vshrl.u32 %v413, 16
      %v442 = vshll.u32 %v413, 16
      %v444 = vrot.slane %v442, 1
      %v445 = vor.u32 %v440, %v444
      %v447 = vshrl.u32 %v414, 16
      %v449 = vshll.u32 %v414, 16
      %v451 = vrot.slane %v449, 1
      %v452 = vor.u32 %v447, %v451
      %v454 = vshrl.u32 %v415, 16
      %v456 = vshll.u32 %v415, 16
      %v458 = vrot.slane %v456, 1
      %v459 = vor.u32 %v454, %v458
      %v461 = vshrl.u32 %v416, 16
      %v463 = vshll.u32 %v416, 16
      %v465 = vrot.slane %v463, 1
      %v466 = vor.u32 %v461, %v465
      %v468 = vshrl.u32 %v417, 16
      %v470 = vshll.u32 %v417, 16
      %v472 = vrot.slane %v470, 1
      %v473 = vor.u32 %v468, %v472
      %474 = vrot.lane.b32.xlu0 %v424, 8
      %v475 = vpop.permute.xlu0 %474
      %476 = vrot.lane.b32.xlu0 %v431, 8
      %v477 = vpop.permute.xlu0 %476
      %478 = vrot.lane.b32.xlu0 %v438, 8
      %v479 = vpop.permute.xlu0 %478
      %480 = vrot.lane.b32.xlu0 %v445, 8
      %v481 = vpop.permute.xlu0 %480
      %482 = vrot.lane.b32.xlu0 %v452, 8
      %v483 = vpop.permute.xlu0 %482
      %484 = vrot.lane.b32.xlu0 %v459, 8
      %v485 = vpop.permute.xlu0 %484
      %486 = vrot.lane.b32.xlu0 %v466, 8
      %v487 = vpop.permute.xlu0 %486
      %488 = vrot.lane.b32.xlu0 %v473, 8
      %v489 = vpop.permute.xlu0 %488
      %v498 = vunpack.c.l.b16 %v280
      %v499 = vunpack.c.l.b16 %v281
      %v500 = vunpack.c.l.b16 %v282
      %v501 = vunpack.c.l.b16 %v283
      %v502 = vunpack.c.l.b16 %v284
      %v503 = vunpack.c.l.b16 %v285
      %v504 = vunpack.c.l.b16 %v286
      %v505 = vunpack.c.l.b16 %v287
      %v506 = vpack.c.b16 %v498, %v498
      %v507 = vpack.c.b16 %v499, %v499
      %v508 = vpack.c.b16 %v500, %v500
      %v509 = vpack.c.b16 %v501, %v501
      %v510 = vpack.c.b16 %v502, %v502
      %v511 = vpack.c.b16 %v503, %v503
      %v512 = vpack.c.b16 %v504, %v504
      %v513 = vpack.c.b16 %v505, %v505
      %514 = vrot.lane.b32.xlu0 %v506, 12
      %v515 = vpop.permute.xlu0 %514
      %516 = vrot.lane.b32.xlu0 %v507, 12
      %v517 = vpop.permute.xlu0 %516
      %518 = vrot.lane.b32.xlu0 %v508, 12
      %v519 = vpop.permute.xlu0 %518
      %520 = vrot.lane.b32.xlu0 %v509, 12
      %v521 = vpop.permute.xlu0 %520
      %522 = vrot.lane.b32.xlu0 %v510, 12
      %v523 = vpop.permute.xlu0 %522
      %524 = vrot.lane.b32.xlu0 %v511, 12
      %v525 = vpop.permute.xlu0 %524
      %526 = vrot.lane.b32.xlu0 %v512, 12
      %v527 = vpop.permute.xlu0 %526
      %528 = vrot.lane.b32.xlu0 %v513, 12
      %v529 = vpop.permute.xlu0 %528
      %v538 = vunpack.c.l.b16 %v291
      %v539 = vunpack.c.l.b16 %v292
      %v540 = vunpack.c.l.b16 %v293
      %v541 = vunpack.c.l.b16 %v294
      %v542 = vunpack.c.l.b16 %v295
      %v543 = vunpack.c.l.b16 %v296
      %v544 = vunpack.c.l.b16 %v297
      %v545 = vunpack.c.l.b16 %v298
      %v546 = vpack.c.b16 %v538, %v538
      %v547 = vpack.c.b16 %v539, %v539
      %v548 = vpack.c.b16 %v540, %v540
      %v549 = vpack.c.b16 %v541, %v541
      %v550 = vpack.c.b16 %v542, %v542
      %v551 = vpack.c.b16 %v543, %v543
      %v552 = vpack.c.b16 %v544, %v544
      %v553 = vpack.c.b16 %v545, %v545
      %554 = vrot.lane.b32.xlu0 %v546, 16
      %v555 = vpop.permute.xlu0 %554
      %556 = vrot.lane.b32.xlu0 %v547, 16
      %v557 = vpop.permute.xlu0 %556
      %558 = vrot.lane.b32.xlu0 %v548, 16
      %v559 = vpop.permute.xlu0 %558
      %560 = vrot.lane.b32.xlu0 %v549, 16
      %v561 = vpop.permute.xlu0 %560
      %562 = vrot.lane.b32.xlu0 %v550, 16
      %v563 = vpop.permute.xlu0 %562
      %564 = vrot.lane.b32.xlu0 %v551, 16
      %v565 = vpop.permute.xlu0 %564
      %566 = vrot.lane.b32.xlu0 %v552, 16
      %v567 = vpop.permute.xlu0 %566
      %568 = vrot.lane.b32.xlu0 %v553, 16
      %v569 = vpop.permute.xlu0 %568
      %v578 = vunpack.c.l.b16 %v299
      %v579 = vunpack.c.l.b16 %v300
      %v580 = vunpack.c.l.b16 %v301
      %v581 = vunpack.c.l.b16 %v302
      %v582 = vunpack.c.l.b16 %v303
      %v583 = vunpack.c.l.b16 %v304
      %v584 = vunpack.c.l.b16 %v305
      %v585 = vunpack.c.l.b16 %v306
      %v586 = vpack.c.b16 %v578, %v498
      %v587 = vpack.c.b16 %v579, %v499
      %v588 = vpack.c.b16 %v580, %v500
      %v589 = vpack.c.b16 %v581, %v501
      %v590 = vpack.c.b16 %v582, %v502
      %v591 = vpack.c.b16 %v583, %v503
      %v592 = vpack.c.b16 %v584, %v504
      %v593 = vpack.c.b16 %v585, %v505
      %v595 = vshrl.u32 %v586, 16
      %v597 = vshll.u32 %v586, 16
      %v599 = vrot.slane %v597, 1
      %v600 = vor.u32 %v595, %v599
      %v602 = vshrl.u32 %v587, 16
      %v604 = vshll.u32 %v587, 16
      %v606 = vrot.slane %v604, 1
      %v607 = vor.u32 %v602, %v606
      %v609 = vshrl.u32 %v588, 16
      %v611 = vshll.u32 %v588, 16
      %v613 = vrot.slane %v611, 1
      %v614 = vor.u32 %v609, %v613
      %v616 = vshrl.u32 %v589, 16
      %v618 = vshll.u32 %v589, 16
      %v620 = vrot.slane %v618, 1
      %v621 = vor.u32 %v616, %v620
      %v623 = vshrl.u32 %v590, 16
      %v625 = vshll.u32 %v590, 16
      %v627 = vrot.slane %v625, 1
      %v628 = vor.u32 %v623, %v627
      %v630 = vshrl.u32 %v591, 16
      %v632 = vshll.u32 %v591, 16
      %v634 = vrot.slane %v632, 1
      %v635 = vor.u32 %v630, %v634
      %v637 = vshrl.u32 %v592, 16
      %v639 = vshll.u32 %v592, 16
      %v641 = vrot.slane %v639, 1
      %v642 = vor.u32 %v637, %v641
      %v644 = vshrl.u32 %v593, 16
      %v646 = vshll.u32 %v593, 16
      %v648 = vrot.slane %v646, 1
      %v649 = vor.u32 %v644, %v648
      %650 = vrot.lane.b32.xlu0 %v600, 20
      %v651 = vpop.permute.xlu0 %650
      %652 = vrot.lane.b32.xlu0 %v607, 20
      %v653 = vpop.permute.xlu0 %652
      %654 = vrot.lane.b32.xlu0 %v614, 20
      %v655 = vpop.permute.xlu0 %654
      %656 = vrot.lane.b32.xlu0 %v621, 20
      %v657 = vpop.permute.xlu0 %656
      %658 = vrot.lane.b32.xlu0 %v628, 20
      %v659 = vpop.permute.xlu0 %658
      %660 = vrot.lane.b32.xlu0 %v635, 20
      %v661 = vpop.permute.xlu0 %660
      %662 = vrot.lane.b32.xlu0 %v642, 20
      %v663 = vpop.permute.xlu0 %662
      %664 = vrot.lane.b32.xlu0 %v649, 20
      %v665 = vpop.permute.xlu0 %664
      %v674 = vunpack.c.l.b16 %v311
      %v675 = vunpack.c.l.b16 %v312
      %v676 = vunpack.c.l.b16 %v313
      %v677 = vunpack.c.l.b16 %v314
      %v678 = vunpack.c.l.b16 %v315
      %v679 = vunpack.c.l.b16 %v316
      %v680 = vunpack.c.l.b16 %v317
      %v681 = vunpack.c.l.b16 %v318
      %v682 = vpack.c.b16 %v674, %v674
      %v683 = vpack.c.b16 %v675, %v675
      %v684 = vpack.c.b16 %v676, %v676
      %v685 = vpack.c.b16 %v677, %v677
      %v686 = vpack.c.b16 %v678, %v678
      %v687 = vpack.c.b16 %v679, %v679
      %v688 = vpack.c.b16 %v680, %v680
      %v689 = vpack.c.b16 %v681, %v681
      %690 = vrot.lane.b32.xlu0 %v682, 24
      %v691 = vpop.permute.xlu0 %690
      %692 = vrot.lane.b32.xlu0 %v683, 24
      %v693 = vpop.permute.xlu0 %692
      %694 = vrot.lane.b32.xlu0 %v684, 24
      %v695 = vpop.permute.xlu0 %694
      %696 = vrot.lane.b32.xlu0 %v685, 24
      %v697 = vpop.permute.xlu0 %696
      %698 = vrot.lane.b32.xlu0 %v686, 24
      %v699 = vpop.permute.xlu0 %698
      %700 = vrot.lane.b32.xlu0 %v687, 24
      %v701 = vpop.permute.xlu0 %700
      %702 = vrot.lane.b32.xlu0 %v688, 24
      %v703 = vpop.permute.xlu0 %702
      %704 = vrot.lane.b32.xlu0 %v689, 24
      %v705 = vpop.permute.xlu0 %704
      %v714 = vunpack.c.l.b16 %v322
      %v715 = vunpack.c.l.b16 %v323
      %v716 = vunpack.c.l.b16 %v324
      %v717 = vunpack.c.l.b16 %v325
      %v718 = vunpack.c.l.b16 %v326
      %v719 = vunpack.c.l.b16 %v327
      %v720 = vunpack.c.l.b16 %v328
      %v721 = vunpack.c.l.b16 %v329
      %v722 = vpack.c.b16 %v714, %v714
      %v723 = vpack.c.b16 %v715, %v715
      %v724 = vpack.c.b16 %v716, %v716
      %v725 = vpack.c.b16 %v717, %v717
      %v726 = vpack.c.b16 %v718, %v718
      %v727 = vpack.c.b16 %v719, %v719
      %v728 = vpack.c.b16 %v720, %v720
      %v729 = vpack.c.b16 %v721, %v721
      %730 = vrot.lane.b32.xlu0 %v722, 28
      %v731 = vpop.permute.xlu0 %730
      %732 = vrot.lane.b32.xlu0 %v723, 28
      %v733 = vpop.permute.xlu0 %732
      %734 = vrot.lane.b32.xlu0 %v724, 28
      %v735 = vpop.permute.xlu0 %734
      %736 = vrot.lane.b32.xlu0 %v725, 28
      %v737 = vpop.permute.xlu0 %736
      %738 = vrot.lane.b32.xlu0 %v726, 28
      %v739 = vpop.permute.xlu0 %738
      %740 = vrot.lane.b32.xlu0 %v727, 28
      %v741 = vpop.permute.xlu0 %740
      %742 = vrot.lane.b32.xlu0 %v728, 28
      %v743 = vpop.permute.xlu0 %742
      %744 = vrot.lane.b32.xlu0 %v729, 28
      %v745 = vpop.permute.xlu0 %744
      %v754 = vunpack.c.l.b16 %v330
      %v755 = vunpack.c.l.b16 %v331
      %v756 = vunpack.c.l.b16 %v332
      %v757 = vunpack.c.l.b16 %v333
      %v758 = vunpack.c.l.b16 %v334
      %v759 = vunpack.c.l.b16 %v335
      %v760 = vunpack.c.l.b16 %v336
      %v761 = vunpack.c.l.b16 %v337
      %v762 = vpack.c.b16 %v754, %v674
      %v763 = vpack.c.b16 %v755, %v675
      %v764 = vpack.c.b16 %v756, %v676
      %v765 = vpack.c.b16 %v757, %v677
      %v766 = vpack.c.b16 %v758, %v678
      %v767 = vpack.c.b16 %v759, %v679
      %v768 = vpack.c.b16 %v760, %v680
      %v769 = vpack.c.b16 %v761, %v681
      %v771 = vshrl.u32 %v762, 16
      %v773 = vshll.u32 %v762, 16
      %v775 = vrot.slane %v773, 1
      %v776 = vor.u32 %v771, %v775
      %v778 = vshrl.u32 %v763, 16
      %v780 = vshll.u32 %v763, 16
      %v782 = vrot.slane %v780, 1
      %v783 = vor.u32 %v778, %v782
      %v785 = vshrl.u32 %v764, 16
      %v787 = vshll.u32 %v764, 16
      %v789 = vrot.slane %v787, 1
      %v790 = vor.u32 %v785, %v789
      %v792 = vshrl.u32 %v765, 16
      %v794 = vshll.u32 %v765, 16
      %v796 = vrot.slane %v794, 1
      %v797 = vor.u32 %v792, %v796
      %v799 = vshrl.u32 %v766, 16
      %v801 = vshll.u32 %v766, 16
      %v803 = vrot.slane %v801, 1
      %v804 = vor.u32 %v799, %v803
      %v806 = vshrl.u32 %v767, 16
      %v808 = vshll.u32 %v767, 16
      %v810 = vrot.slane %v808, 1
      %v811 = vor.u32 %v806, %v810
      %v813 = vshrl.u32 %v768, 16
      %v815 = vshll.u32 %v768, 16
      %v817 = vrot.slane %v815, 1
      %v818 = vor.u32 %v813, %v817
      %v820 = vshrl.u32 %v769, 16
      %v822 = vshll.u32 %v769, 16
      %v824 = vrot.slane %v822, 1
      %v825 = vor.u32 %v820, %v824
      %826 = vrot.lane.b32.xlu0 %v776, 32
      %v827 = vpop.permute.xlu0 %826
      %828 = vrot.lane.b32.xlu0 %v783, 32
      %v829 = vpop.permute.xlu0 %828
      %830 = vrot.lane.b32.xlu0 %v790, 32
      %v831 = vpop.permute.xlu0 %830
      %832 = vrot.lane.b32.xlu0 %v797, 32
      %v833 = vpop.permute.xlu0 %832
      %834 = vrot.lane.b32.xlu0 %v804, 32
      %v835 = vpop.permute.xlu0 %834
      %836 = vrot.lane.b32.xlu0 %v811, 32
      %v837 = vpop.permute.xlu0 %836
      %838 = vrot.lane.b32.xlu0 %v818, 32
      %v839 = vpop.permute.xlu0 %838
      %840 = vrot.lane.b32.xlu0 %v825, 32
      %v841 = vpop.permute.xlu0 %840
      %vm842 = vcmask 31744
      %v845 = vsel %vm842, %v250, %v363
      %v848 = vsel %vm842, %v251, %v365
      %v851 = vsel %vm842, %v252, %v367
      %v854 = vsel %vm842, %v253, %v369
      %v857 = vsel %vm842, %v254, %v371
      %v860 = vsel %vm842, %v255, %v373
      %v863 = vsel %vm842, %v256, %v375
      %v866 = vsel %vm842, %v257, %v377
      %vm867 = vcmask 64512
      %v869 = vsel %vm867, %v845, %v475
      %v871 = vsel %vm867, %v848, %v477
      %v873 = vsel %vm867, %v851, %v479
      %v875 = vsel %vm867, %v854, %v481
      %v877 = vsel %vm867, %v857, %v483
      %v879 = vsel %vm867, %v860, %v485
      %v881 = vsel %vm867, %v863, %v487
      %v883 = vsel %vm867, %v866, %v489
      %vm884 = vcmask 97280
      %v886 = vsel %vm884, %v869, %v515
      %v888 = vsel %vm884, %v871, %v517
      %v890 = vsel %vm884, %v873, %v519
      %v892 = vsel %vm884, %v875, %v521
      %v894 = vsel %vm884, %v877, %v523
      %v896 = vsel %vm884, %v879, %v525
      %v898 = vsel %vm884, %v881, %v527
      %v900 = vsel %vm884, %v883, %v529
      %vm901 = vcmask 130048
      %v903 = vsel %vm901, %v886, %v555
      %v905 = vsel %vm901, %v888, %v557
      %v907 = vsel %vm901, %v890, %v559
      %v909 = vsel %vm901, %v892, %v561
      %v911 = vsel %vm901, %v894, %v563
      %v913 = vsel %vm901, %v896, %v565
      %v915 = vsel %vm901, %v898, %v567
      %v917 = vsel %vm901, %v900, %v569
      %vm918 = vcmask 162816
      %v920 = vsel %vm918, %v903, %v651
      %v922 = vsel %vm918, %v905, %v653
      %v924 = vsel %vm918, %v907, %v655
      %v926 = vsel %vm918, %v909, %v657
      %v928 = vsel %vm918, %v911, %v659
      %v930 = vsel %vm918, %v913, %v661
      %v932 = vsel %vm918, %v915, %v663
      %v934 = vsel %vm918, %v917, %v665
      %vm935 = vcmask 195584
      %v937 = vsel %vm935, %v920, %v691
      %v939 = vsel %vm935, %v922, %v693
      %v941 = vsel %vm935, %v924, %v695
      %v943 = vsel %vm935, %v926, %v697
      %v945 = vsel %vm935, %v928, %v699
      %v947 = vsel %vm935, %v930, %v701
      %v949 = vsel %vm935, %v932, %v703
      %v951 = vsel %vm935, %v934, %v705
      %vm952 = vcmask 228352
      %v954 = vsel %vm952, %v937, %v731
      %v956 = vsel %vm952, %v939, %v733
      %v958 = vsel %vm952, %v941, %v735
      %v960 = vsel %vm952, %v943, %v737
      %v962 = vsel %vm952, %v945, %v739
      %v964 = vsel %vm952, %v947, %v741
      %v966 = vsel %vm952, %v949, %v743
      %v968 = vsel %vm952, %v951, %v745
      %vm969 = vcmask 261120
      %v971 = vsel %vm969, %v954, %v827
      %v973 = vsel %vm969, %v956, %v829
      %v975 = vsel %vm969, %v958, %v831
      %v977 = vsel %vm969, %v960, %v833
      %v979 = vsel %vm969, %v962, %v835
      %v981 = vsel %vm969, %v964, %v837
      %v983 = vsel %vm969, %v966, %v839
      %v985 = vsel %vm969, %v968, %v841
      %v986 = vld [vmem:[%s228] sm:$0xf]
      %v987 = vld [vmem:[%s228 + $0x4] sm:$0xf]
      %v988 = vld [vmem:[%s228 + $0x8] sm:$0xf]
      %v989 = vld [vmem:[%s228 + $0xc] sm:$0xf]
      %v990 = vld [vmem:[%s228 + $0x10] sm:$0x3]
      %v991 = vld [vmem:[%s231] sm:$0x1]
      %v993 = vlaneseq
      %v994 = vshrl.u32 %v993, 7
      %v995 = vsub.s32 0, %v994
      %v996 = vrot.slane %v991, %v995
      %v1006 = vunpack.c.l.b16 %v971
      %v1007 = vunpack.c.l.b16 %v973
      %v1008 = vunpack.c.l.b16 %v975
      %v1009 = vunpack.c.l.b16 %v977
      %v1010 = vunpack.c.l.b16 %v979
      %v1011 = vunpack.c.l.b16 %v981
      %v1012 = vunpack.c.l.b16 %v983
      %v1013 = vunpack.c.l.b16 %v985
      %v1014 = vpack.c.b16 %v1007, %v1006
      %v1015 = vpack.c.b16 %v1009, %v1008
      %v1016 = vpack.c.b16 %v1011, %v1010
      %v1017 = vpack.c.b16 %v1013, %v1012
      %v1023 = vunpack.c.l.b16 %v986
      %v1024 = vunpack.c.l.b16 %v987
      %v1025 = vunpack.c.l.b16 %v988
      %v1026 = vunpack.c.l.b16 %v989
      %v1027 = vunpack.c.l.b16 %v990
      %v1028 = vpack.c.b16 %v1024, %v1023
      %v1029 = vpack.c.b16 %v1026, %v1025
      %v1030 = vpack.c.b16 %v1027, %v1027
      %vm1033 = vcmask 293888
      %v1035 = vsel %vm1033, %v1014, 0
      %v1038 = vsel %vm1033, %v1015, 0
      %v1041 = vsel %vm1033, %v1016, 0
      %v1044 = vsel %vm1033, %v1017, 0
      %vm1046 = vcmask 1041408
      %v1048 = vsel %vm1046, %v1030, 0
      %1050 = vmatprep.subr.bf16.mxu0 0
      %1051 = vmatpush1.bf16.msra.mxu0 %v1028
      %1052 = vmatprep.subr.bf16.mxu0 0
      %1053 = vmatpush1.bf16.msra.mxu0 %v1029
      %1054 = vmatprep.subr.bf16.mxu0 0
      %1055 = vmatpush1.bf16.msra.mxu0 %v1048
      %1056 = vmatprep.subr.bf16.mxu0 0
      %1057 = vmatpush1.bf16.msra.mxu0 0
      %1058 = vmatprep.subr.bf16.mxu0 0
      %1059 = vmatpush1.bf16.msra.mxu0 0
      %1060 = vmatprep.subr.bf16.mxu0 0
      %1061 = vmatpush1.bf16.msra.mxu0 0
      %1062 = vmatprep.subr.bf16.mxu0 0
      %1063 = vmatpush1.bf16.msra.mxu0 0
      %1064 = vmatprep.subr.bf16.mxu0 0
      %1065 = vmatpush1.bf16.msra.mxu0 0
      %1066 = vmatprep.subr.bf16.mxu0 0
      %1067 = vmatpush1.bf16.msra.mxu0 0
      %1068 = vmatprep.subr.bf16.mxu0 0
      %1069 = vmatpush1.bf16.msra.mxu0 0
      %1070 = vmatprep.subr.bf16.mxu0 0
      %1071 = vmatpush1.bf16.msra.mxu0 0
      %1072 = vmatprep.subr.bf16.mxu0 0
      %1073 = vmatpush1.bf16.msra.mxu0 0
      %1074 = vmatprep.subr.bf16.mxu0 0
      %1075 = vmatpush1.bf16.msra.mxu0 0
      %1076 = vmatprep.subr.bf16.mxu0 0
      %1077 = vmatpush1.bf16.msra.mxu0 0
      %1078 = vmatprep.subr.bf16.mxu0 0
      %1079 = vmatpush1.bf16.msra.mxu0 0
      %1080 = vmatprep.subr.bf16.mxu0 0
      %1081 = vmatpush1.bf16.msra.mxu0 0
      %1082 = vmatprep.mubr.bf16.mxu0 0
      %1083 = vmatmul.mubr.bf16.gmra.mrb[0].mxu0 %v1035
      %v1084 = vpop.f32.mrb[0].mxu0
      %v1085 = vadd.f32 %v996, %v1084
      %v1086 = vpop.f32.mrb[0].mxu0
      %v1087 = vpop.f32.mrb[0].mxu0
      %v1088 = vadd.f32 %v996, %v1087
      %v1089 = vpop.f32.mrb[0].mxu0
      %1090 = vmatprep.mubr.bf16.mxu0 0
      %1091 = vmatmul.mubr.bf16.gmra.mrb[0].mxu0 %v1038
      %v1092 = vpop.f32.mrb[0].mxu0
      %v1093 = vadd.f32 %v996, %v1092
      %v1094 = vpop.f32.mrb[0].mxu0
      %v1095 = vpop.f32.mrb[0].mxu0
      %v1096 = vadd.f32 %v996, %v1095
      %v1097 = vpop.f32.mrb[0].mxu0
      %1098 = vmatprep.mubr.bf16.mxu0 0
      %1099 = vmatmul.mubr.bf16.gmra.mrb[0].mxu0 %v1041
      %v1100 = vpop.f32.mrb[0].mxu0
      %v1101 = vadd.f32 %v996, %v1100
      %v1102 = vpop.f32.mrb[0].mxu0
      %v1103 = vpop.f32.mrb[0].mxu0
      %v1104 = vadd.f32 %v996, %v1103
      %v1105 = vpop.f32.mrb[0].mxu0
      %1106 = vmatprep.mubr.bf16.mxu0 0
      %1107 = vmatmul.mubr.bf16.gmra.mrb[0].mxu0 %v1044
      %v1108 = vpop.f32.mrb[0].mxu0
      %v1109 = vadd.f32 %v996, %v1108
      %v1110 = vpop.f32.mrb[0].mxu0
      %v1111 = vpop.f32.mrb[0].mxu0
      %v1112 = vadd.f32 %v996, %v1111
      %v1113 = vpop.f32.mrb[0].mxu0
      %1114 = vdwg.mxu0
      %v1115 = vmax.f32 %v1085, 0.0
      %v1116 = vmax.f32 %v1088, 0.0
      %v1117 = vmax.f32 %v1093, 0.0
      %v1118 = vmax.f32 %v1096, 0.0
      %v1119 = vmax.f32 %v1101, 0.0
      %v1120 = vmax.f32 %v1104, 0.0
      %v1121 = vmax.f32 %v1109, 0.0
      %v1122 = vmax.f32 %v1112, 0.0
      %v1123 = vpack.c.bf16 %v1115, %v1115
      %v1124 = vpack.c.bf16 %v1116, %v1116
      %v1125 = vpack.c.bf16 %v1117, %v1117
      %v1126 = vpack.c.bf16 %v1118, %v1118
      %v1127 = vpack.c.bf16 %v1119, %v1119
      %v1128 = vpack.c.bf16 %v1120, %v1120
      %v1129 = vpack.c.bf16 %v1121, %v1121
      %v1130 = vpack.c.bf16 %v1122, %v1122
      %vm1131 = vcmask 60416
      %1132 = vst.msk [vmem:[%s243] sm:$0xf] %vm1131, %v1123
      %1133 = vst.msk [vmem:[%s243 + $0x4] sm:$0xf] %vm1131, %v1124
      %1134 = vst.msk [vmem:[%s243 + $0x8] sm:$0xf] %vm1131, %v1125
      %1135 = vst.msk [vmem:[%s243 + $0xc] sm:$0xf] %vm1131, %v1126
      %1136 = vst.msk [vmem:[%s243 + $0x10] sm:$0xf] %vm1131, %v1127
      %1137 = vst.msk [vmem:[%s243 + $0x14] sm:$0xf] %vm1131, %v1128
      %1138 = vst.msk [vmem:[%s243 + $0x18] sm:$0xf] %vm1131, %v1129
      %1139 = vst.msk [vmem:[%s243 + $0x1c] sm:$0xf] %vm1131, %v1130
      %s1140 = smul.u32 8, %s20
      %p1141 = scmp.lt.s32.totalorder %s19, 1
      %s1142 = scalar_select %p1141, %s19, 1
      %p1143 = scmp.lt.s32.totalorder %s1140, 7
      %s1144 = scalar_select %p1143, %s1140, 7
      %p1145 = scmp.lt.s32.totalorder %s21, 0
      %s1146 = scalar_select %p1145, %s21, 0
      %s1147 = sadd.s32 %s1146, %s1144
      %s1148 = smul.addr %s1142, 8
      %s1149 = sadd.s32 %s1147, %s1148
      %s1150 = smul.addr %s1149, 4
      %s1151 = scalar_lea.vmem %s3, %s1150
      // Predicated region
      $region33: #{basic_block_forward.2} parent=31 // pred_check
        %p1152 = pneg %p133
      $region34: #{basic_block_forward.2} parent=31 // pred_check_branch
        %1154 = sbr.rel (%p1152) target = $region36
      $region35: #{basic_block_forward.2} parent=31 // pred_region
        %s1155 = smul.u32 8, %s20
      $region36: #{basic_block_forward.2} parent=31 // pred_fallthru
        _
    $region32: #{basic_block_forward.2} parent=5 // pred_fallthru
      _
    %p1156 = scmp.le.s32.totalorder 2, %s9
    // Predicated region
    $region37: #{basic_block_forward.2} parent=5 // pred_check
      %p1157 = pneg %p1156
    $region38: #{basic_block_forward.2} parent=5 // pred_check_branch
      %1159 = sbr.rel (%p1157) target = $region40
    $region39: #{basic_block_forward.2} parent=5 // pred_region
      %s1160 = ssub.s32 %s9, 2
      // Predicated region
      $region41: #{basic_block_forward.2} parent=39 // pred_check
        %p1161 = pneg %p139
      $region42: #{basic_block_forward.2} parent=39 // pred_check_branch
        %1163 = sbr.rel (%p1161) target = $region44
      $region43: #{basic_block_forward.2} parent=39 // pred_region
        %s1164 = smul.u32 8, %s23
        %p1165 = scmp.lt.s32.totalorder %s22, 1
        %s1166 = scalar_select %p1165, %s22, 1
        %p1167 = scmp.lt.s32.totalorder %s1164, 7
        %s1168 = scalar_select %p1167, %s1164, 7
        %p1169 = scmp.lt.s32.totalorder %s24, 0
        %s1170 = scalar_select %p1169, %s24, 0
        %s1171 = sadd.s32 %s1170, %s1168
        %s1172 = smul.addr %s1166, 8
        %s1173 = sadd.s32 %s1171, %s1172
        %s1174 = smul.addr %s1173, 4
        %s1175 = scalar_lea.vmem %s3, %s1174
      $region44: #{basic_block_forward.2} parent=39 // pred_fallthru
        _
    $region40: #{basic_block_forward.2} parent=5 // pred_fallthru
      _
  $region6: #{basic_block_forward.2} parent=0 // loop_footer
    %s13 = sadd.s32 1, %s9
  $region7: #{basic_block_forward.2} parent=0 // loop_footer_branch
    %8 = sbr.rel target = $region3
  $region8: #{basic_block_forward.2} parent=0 // loop_exit
    _

// kernel: basic_block_forward.3
$region0: #{basic_block_forward.3}
  #allocation0 [shape = 'u32[]', space=smem, size = 0x4, offset = 0x4, fixed_abs, tag = 'smem constant byte address 0x4 - core index']
  #allocation1 [shape = 'u32[144,128]{1,0:T(1,128)}', space=vmem, size = 0x12000, scoped, tag = 'internal scratch']
  #allocation2 [shape = 'bf16[10,10,8]{2,1,0:T(8,128)(2,1)}', space=vmem, size = 0xa000, scoped, tag = 'scratch operand']
  %s0 = inlined_call_operand.vmem [shape: bf16[2,8,8,8], index: 0, kind: input, shape index: {}]
  %s1 = inlined_call_operand.vmem [shape: bf16[72,8], index: 1, kind: input, shape index: {}]
  %s2 = inlined_call_operand.vmem [shape: f32[1,8], index: 2, kind: input, shape index: {}]
  %s3 = inlined_call_operand.vmem [shape: bf16[8,9,9,4], index: 3, kind: input, shape index: {}]
  %s4 = inlined_call_operand.vmem [shape: bf16[4,8], index: 4, kind: input, shape index: {}]
  %s5 = inlined_call_operand.vmem [shape: f32[2,8,8,8], index: 5, kind: output, shape index: {}]
  %s6 = sld [smem:[#allocation0]]
  $region57: #{basic_block_forward.3} parent=0
    _
  %s8 = ssub.s32 1, %s6
  %s9 = scalar_select 0, %s8, %s6
  loop: start=0, step=1, limit=4
  $region2: #{basic_block_forward.3} parent=0 // loop_pre_header
    _
  $region3: #{basic_block_forward.3} parent=0 // loop_header
    %s11 = sphi 0, %s15
    %p12 = scmp.ge.s32.totalorder %s11, 4
    %s18 = sphi 0, %s37
    %s19 = sphi 0, %s33
    %s20 = sphi 0, %s29
    %s21 = sphi 0, %s18
    %s22 = sphi 0, %s19
    %s23 = sphi 0, %s20
    %s24 = sphi 0, %s21
    %s25 = sphi 0, %s22
    %s26 = sphi 0, %s23
    %s40 = sphi 0, %s42
    %s43 = sphi 0, %s40
    %s44 = sphi 0, %s43
    %s60 = sphi 0, %s44
    %s66 = sphi 0, %s68
    %s69 = sphi 0, %s66
    %s70 = sphi 0, %s69
    %s86 = sphi 0, %s70
    %s92 = sphi 0, %s94
    %s95 = sphi 0, %s92
    %s96 = sphi 0, %s95
    %s112 = sphi 0, %s96
    %s124 = sphi 0, %s126
    %s127 = sphi 0, %s124
    %s128 = sphi 0, %s127
    %s144 = sphi 0, %s128
    %s150 = sphi 0, %s152
    %s153 = sphi 0, %s150
    %s154 = sphi 0, %s153
    %s170 = sphi 0, %s154
    %s180 = sphi 0, %s182
    %s183 = sphi 0, %s180
    %s184 = sphi 0, %s183
    %s200 = sphi 0, %s184
  $region4: #{basic_block_forward.3} parent=0 // loop_header_branch
    %14 = sbr.rel (%p12) target = $region8
  $region5: #{basic_block_forward.3} parent=0 // loop_body
    %s16 = ssub.s32 %s11, 1
    %s17 = ssub.s32 %s11, 2
    %s27 = sadd.s32 1, %s20
    %p28 = scmp.ge.s32.totalorder %s27, 1
    %s29 = scalar_select %p28, 0, %s27
    %s30 = sadd.s32 1, %s19
    %s31 = scalar_select %p28, %s30, %s19
    %p32 = scmp.ge.s32.totalorder %s31, 1
    %s33 = scalar_select %p32, 0, %s31
    %s34 = sadd.s32 1, %s18
    %s35 = scalar_select %p32, %s34, %s18
    %p36 = scmp.ge.s32.totalorder %s35, 2
    %s37 = scalar_select %p36, 0, %s35
    %s38 = ssub.s32 %s18, %s37
    %p39 = scmp.eq.s32.totalorder %s38, 0
    %s41 = sadd.s32 %s40, 1
    %s42 = scalar_select %p39, %s40, %s41
    %p45 = pneg %p39
    %p46 = scmp.eq.s32.totalorder %s11, 1
    %p47 = por %p45, %p46
    %p48 = scmp.ne.s32.totalorder %s40, %s43
    %p49 = scmp.eq.s32.totalorder %s11, 0
    %p50 = por %p48, %p49
    %p51 = scmp.ne.s32.totalorder %s40, %s43
    %p52 = scmp.eq.s32.totalorder %s16, 1
    %p53 = por %p51, %p52
    %p54 = scmp.ne.s32.totalorder %s43, %s44
    %p55 = scmp.eq.s32.totalorder %s16, 0
    %p56 = por %p54, %p55
    %p57 = scmp.ne.s32.totalorder %s43, %s44
    %p58 = scmp.eq.s32.totalorder %s17, 1
    %p59 = por %p57, %p58
    %p61 = scmp.ne.s32.totalorder %s44, %s60
    %p62 = scmp.eq.s32.totalorder %s17, 0
    %p63 = por %p61, %p62
    %s64 = ssub.s32 %s20, %s29
    %p65 = scmp.eq.s32.totalorder %s64, 0
    %s67 = sadd.s32 %s66, 1
    %s68 = scalar_select %p65, %s66, %s67
    %p71 = pneg %p65
    %p72 = scmp.eq.s32.totalorder %s11, 1
    %p73 = por %p71, %p72
    %p74 = scmp.ne.s32.totalorder %s66, %s69
    %p75 = scmp.eq.s32.totalorder %s11, 0
    %p76 = por %p74, %p75
    %p77 = scmp.ne.s32.totalorder %s66, %s69
    %p78 = scmp.eq.s32.totalorder %s16, 1
    %p79 = por %p77, %p78
    %p80 = scmp.ne.s32.totalorder %s69, %s70
    %p81 = scmp.eq.s32.totalorder %s16, 0
    %p82 = por %p80, %p81
    %p83 = scmp.ne.s32.totalorder %s69, %s70
    %p84 = scmp.eq.s32.totalorder %s17, 1
    %p85 = por %p83, %p84
    %p87 = scmp.ne.s32.totalorder %s70, %s86
    %p88 = scmp.eq.s32.totalorder %s17, 0
    %p89 = por %p87, %p88
    %s90 = ssub.s32 %s20, %s29
    %p91 = scmp.eq.s32.totalorder %s90, 0
    %s93 = sadd.s32 %s92, 1
    %s94 = scalar_select %p91, %s92, %s93
    %p97 = pneg %p91
    %p98 = scmp.eq.s32.totalorder %s11, 1
    %p99 = por %p97, %p98
    %p100 = scmp.ne.s32.totalorder %s92, %s95
    %p101 = scmp.eq.s32.totalorder %s11, 0
    %p102 = por %p100, %p101
    %p103 = scmp.ne.s32.totalorder %s92, %s95
    %p104 = scmp.eq.s32.totalorder %s16, 1
    %p105 = por %p103, %p104
    %p106 = scmp.ne.s32.totalorder %s95, %s96
    %p107 = scmp.eq.s32.totalorder %s16, 0
    %p108 = por %p106, %p107
    %p109 = scmp.ne.s32.totalorder %s95, %s96
    %p110 = scmp.eq.s32.totalorder %s17, 1
    %p111 = por %p109, %p110
    %p113 = scmp.ne.s32.totalorder %s96, %s112
    %p114 = scmp.eq.s32.totalorder %s17, 0
    %p115 = por %p113, %p114
    %s116 = smul.u32 %s18, 4
    %s117 = sadd.s32 %s116, 3
    %s118 = smul.u32 %s37, 4
    %s119 = sadd.s32 %s118, 3
    %s120 = ssub.s32 %s117, %s119
    %s121 = ssub.s32 %s19, %s33
    %s122 = sor.u32 %s120, %s121
    %p123 = scmp.eq.s32.totalorder %s122, 0
    %s125 = sadd.s32 %s124, 1
    %s126 = scalar_select %p123, %s124, %s125
    %p129 = pneg %p123
    %p130 = scmp.eq.s32.totalorder %s11, 1
    %p131 = por %p129, %p130
    %p132 = scmp.ne.s32.totalorder %s124, %s127
    %p133 = scmp.eq.s32.totalorder %s11, 0
    %p134 = por %p132, %p133
    %p135 = scmp.ne.s32.totalorder %s124, %s127
    %p136 = scmp.eq.s32.totalorder %s16, 1
    %p137 = por %p135, %p136
    %p138 = scmp.ne.s32.totalorder %s127, %s128
    %p139 = scmp.eq.s32.totalorder %s16, 0
    %p140 = por %p138, %p139
    %p141 = scmp.ne.s32.totalorder %s127, %s128
    %p142 = scmp.eq.s32.totalorder %s17, 1
    %p143 = por %p141, %p142
    %p145 = scmp.ne.s32.totalorder %s128, %s144
    %p146 = scmp.eq.s32.totalorder %s17, 0
    %p147 = por %p145, %p146
    %s148 = ssub.s32 %s20, %s29
    %p149 = scmp.eq.s32.totalorder %s148, 0
    %s151 = sadd.s32 %s150, 1
    %s152 = scalar_select %p149, %s150, %s151
    %p155 = pneg %p149
    %p156 = scmp.eq.s32.totalorder %s11, 1
    %p157 = por %p155, %p156
    %p158 = scmp.ne.s32.totalorder %s150, %s153
    %p159 = scmp.eq.s32.totalorder %s11, 0
    %p160 = por %p158, %p159
    %p161 = scmp.ne.s32.totalorder %s150, %s153
    %p162 = scmp.eq.s32.totalorder %s16, 1
    %p163 = por %p161, %p162
    %p164 = scmp.ne.s32.totalorder %s153, %s154
    %p165 = scmp.eq.s32.totalorder %s16, 0
    %p166 = por %p164, %p165
    %p167 = scmp.ne.s32.totalorder %s153, %s154
    %p168 = scmp.eq.s32.totalorder %s17, 1
    %p169 = por %p167, %p168
    %p171 = scmp.ne.s32.totalorder %s154, %s170
    %p172 = scmp.eq.s32.totalorder %s17, 0
    %p173 = por %p171, %p172
    %s174 = ssub.s32 %s18, %s37
    %s175 = ssub.s32 %s19, %s33
    %s176 = sor.u32 %s174, %s175
    %s177 = ssub.s32 %s20, %s29
    %s178 = sor.u32 %s176, %s177
    %p179 = scmp.eq.s32.totalorder %s178, 0
    %s181 = sadd.s32 %s180, 1
    %s182 = scalar_select %p179, %s180, %s181
    %p185 = pneg %p179
    %p186 = scmp.eq.s32.totalorder %s11, 1
    %p187 = por %p185, %p186
    %p188 = scmp.ne.s32.totalorder %s180, %s183
    %p189 = scmp.eq.s32.totalorder %s11, 0
    %p190 = por %p188, %p189
    %p191 = scmp.ne.s32.totalorder %s180, %s183
    %p192 = scmp.eq.s32.totalorder %s16, 1
    %p193 = por %p191, %p192
    %p194 = scmp.ne.s32.totalorder %s183, %s184
    %p195 = scmp.eq.s32.totalorder %s16, 0
    %p196 = por %p194, %p195
    %p197 = scmp.ne.s32.totalorder %s183, %s184
    %p198 = scmp.eq.s32.totalorder %s17, 1
    %p199 = por %p197, %p198
    %p201 = scmp.ne.s32.totalorder %s184, %s200
    %p202 = scmp.eq.s32.totalorder %s17, 0
    %p203 = por %p201, %p202
    %p204 = scmp.le.s32.totalorder 1, %s11
    %p205 = scmp.lt.s32.totalorder %s11, 3
    %p206 = pnand %p204, %p205
    %p207 = pneg %p206
    // Predicated region
    $region9: #{basic_block_forward.3} parent=5 // pred_check
      _
    $region10: #{basic_block_forward.3} parent=5 // pred_check_branch
      %209 = sbr.rel (%p206) target = $region12
    $region11: #{basic_block_forward.3} parent=5 // pred_region
      %s210 = ssub.s32 %s11, 1
      // Predicated region
      $region13: #{basic_block_forward.3} parent=11 // pred_check
        %p211 = pneg %p82
      $region14: #{basic_block_forward.3} parent=11 // pred_check_branch
        %213 = sbr.rel (%p211) target = $region16
      $region15: #{basic_block_forward.3} parent=11 // pred_region
        %p214 = scmp.lt.s32.totalorder %s23, 0
        %s215 = scalar_select %p214, %s23, 0
        %s216 = smul.addr %s215, 4
        %s217 = scalar_lea.vmem %s1, %s216
      $region16: #{basic_block_forward.3} parent=11 // pred_fallthru
        _
      // Predicated region
      $region17: #{basic_block_forward.3} parent=11 // pred_check
        %p218 = pneg %p108
      $region18: #{basic_block_forward.3} parent=11 // pred_check_branch
        %220 = sbr.rel (%p218) target = $region20
      $region19: #{basic_block_forward.3} parent=11 // pred_region
        %p221 = scmp.lt.s32.totalorder %s23, 0
        %s222 = scalar_select %p221, %s23, 0
        %s223 = scalar_lea.vmem %s2, %s222
      $region20: #{basic_block_forward.3} parent=11 // pred_fallthru
        _
      // Predicated region
      $region21: #{basic_block_forward.3} parent=11 // pred_check
        %p224 = pneg %p166
      $region22: #{basic_block_forward.3} parent=11 // pred_check_branch
        %226 = sbr.rel (%p224) target = $region24
      $region23: #{basic_block_forward.3} parent=11 // pred_region
        %p227 = scmp.lt.s32.totalorder %s23, 0
        %s228 = scalar_select %p227, %s23, 0
        %s229 = smul.addr %s228, 2
        %s230 = scalar_lea.vmem %s4, %s229
      $region24: #{basic_block_forward.3} parent=11 // pred_fallthru
        _
    $region12: #{basic_block_forward.3} parent=5 // pred_fallthru
      _
    %p231 = scmp.lt.s32.totalorder %s11, 2
    // Predicated region
    $region25: #{basic_block_forward.3} parent=5 // pred_check
      %p232 = pneg %p231
    $region26: #{basic_block_forward.3} parent=5 // pred_check_branch
      %234 = sbr.rel (%p232) target = $region28
    $region27: #{basic_block_forward.3} parent=5 // pred_region
      // Predicated region
      $region29: #{basic_block_forward.3} parent=27 // pred_check
        %p235 = pneg %p50
      $region30: #{basic_block_forward.3} parent=27 // pred_check_branch
        %237 = sbr.rel (%p235) target = $region32
      $region31: #{basic_block_forward.3} parent=27 // pred_region
        %p238 = scmp.lt.s32.totalorder %s18, 1
        %s239 = scalar_select %p238, %s18, 1
        %s240 = smul.addr %s239, 8
        %s241 = smul.addr %s240, 4
        %s242 = scalar_lea.vmem %s0, %s241
      $region32: #{basic_block_forward.3} parent=27 // pred_fallthru
        _
      // Predicated region
      $region33: #{basic_block_forward.3} parent=27 // pred_check
        %p243 = pneg %p134
      $region34: #{basic_block_forward.3} parent=27 // pred_check_branch
        %245 = sbr.rel (%p243) target = $region36
      $region35: #{basic_block_forward.3} parent=27 // pred_region
        %s246 = smul.u32 %s18, 4
        %s247 = sadd.s32 %s246, 3
        %s248 = smul.u32 8, %s19
        %s249 = ssub.s32 9, %s248
        %p250 = scmp.lt.s32.totalorder %s249, 8
        %s251 = scalar_select %p250, %s249, 8
        %s252 = smul.u32 64, %s251
        %s253 = smul.u32 %s252, 2
        %p254 = scmp.lt.s32.totalorder %s247, 7
        %s255 = scalar_select %p254, %s247, 7
        %p256 = scmp.lt.s32.totalorder %s248, 8
        %s257 = scalar_select %p256, %s248, 8
        %s258 = smul.addr %s257, 2
        %s259 = smul.addr %s255, 18
        %s260 = sadd.s32 %s258, %s259
        %s261 = smul.addr %s260, 4
        %s262 = scalar_lea.vmem %s3, %s261
        %s263 = smul.u32 %s18, 4
        %s264 = sadd.s32 %s263, 3
        %s265 = smul.u32 8, %s19
        %s266 = ssub.s32 9, %s265
        %p267 = scmp.lt.s32.totalorder %s266, 8
        %s268 = scalar_select %p267, %s266, 8
        %s269 = smul.u32 64, %s268
        %s270 = smul.u32 %s269, 2
      $region36: #{basic_block_forward.3} parent=27 // pred_fallthru
        _
    $region28: #{basic_block_forward.3} parent=5 // pred_fallthru
      _
    %p271 = scmp.le.s32.totalorder 1, %s11
    %p272 = scmp.lt.s32.totalorder %s11, 3
    %p273 = pnand %p271, %p272
    %p274 = pneg %p273
    // Predicated region
    $region37: #{basic_block_forward.3} parent=5 // pred_check
      _
    $region38: #{basic_block_forward.3} parent=5 // pred_check_branch
      %276 = sbr.rel (%p273) target = $region40
    $region39: #{basic_block_forward.3} parent=5 // pred_region
      %s277 = ssub.s32 %s11, 1
      %p278 = scmp.lt.s32.totalorder %s21, 1
      %s279 = scalar_select %p278, %s21, 1
      %s280 = smul.addr %s279, 8
      %s281 = smul.addr %s280, 4
      %s282 = scalar_lea.vmem %s0, %s281
      %p283 = pneg %p56
      %p284 = pneg %p53
      %p285 = scmp.lt.s32.totalorder %s23, 0
      %s286 = scalar_select %p285, %s23, 0
      %s287 = smul.addr %s286, 4
      %s288 = scalar_lea.vmem %s1, %s287
      %p289 = pneg %p82
      %p290 = pneg %p79
      %p291 = scmp.lt.s32.totalorder %s23, 0
      %s292 = scalar_select %p291, %s23, 0
      %s293 = scalar_lea.vmem %s2, %s292
      %p294 = pneg %p108
      %p295 = pneg %p105
      %s296 = smul.u32 %s21, 4
      %s297 = sadd.s32 %s296, 3
      %s298 = smul.u32 8, %s22
      %s299 = ssub.s32 9, %s298
      %p300 = scmp.lt.s32.totalorder %s299, 8
      %s301 = scalar_select %p300, %s299, 8
      %s302 = smul.u32 64, %s301
      %s303 = smul.u32 %s302, 2
      %p304 = scmp.lt.s32.totalorder %s297, 7
      %s305 = scalar_select %p304, %s297, 7
      %p306 = scmp.lt.s32.totalorder %s298, 8
      %s307 = scalar_select %p306, %s298, 8
      %s308 = smul.addr %s307, 2
      %s309 = smul.addr %s305, 18
      %s310 = sadd.s32 %s308, %s309
      %s311 = smul.addr %s310, 4
      %s312 = scalar_lea.vmem %s3, %s311
      %p313 = pneg %p140
      %p314 = pneg %p137
      %p315 = scmp.lt.s32.totalorder %s23, 0
      %s316 = scalar_select %p315, %s23, 0
      %s317 = smul.addr %s316, 2
      %s318 = scalar_lea.vmem %s4, %s317
      %p319 = pneg %p166
      %p320 = pneg %p163
      %p321 = pneg %p196
      %p322 = pneg %p193
      %s323 = smul.u32 8, %s22
      %p324 = scmp.lt.s32.totalorder %s21, 1
      %s325 = scalar_select %p324, %s21, 1
      %p326 = scmp.lt.s32.totalorder %s323, 7
      %s327 = scalar_select %p326, %s323, 7
      %p328 = scmp.lt.s32.totalorder %s23, 0
      %s329 = scalar_select %p328, %s23, 0
      %s330 = sadd.s32 %s329, %s327
      %s331 = smul.addr %s325, 8
      %s332 = sadd.s32 %s330, %s331
      %s333 = smul.addr %s332, 8
      %s334 = scalar_lea.vmem %s5, %s333
      %p335 = scmp.lt.s32.totalorder %s21, 1
      %s336 = scalar_select %p335, %s21, 1
      %s337 = smul.addr %s336, 8
      %s338 = smul.addr %s337, 4
      %s339 = scalar_lea.vmem %s0, %s338
      %p340 = scmp.lt.s32.totalorder %s23, 0
      %s341 = scalar_select %p340, %s23, 0
      %s342 = smul.addr %s341, 4
      %s343 = scalar_lea.vmem %s1, %s342
      %p344 = scmp.lt.s32.totalorder %s23, 0
      %s345 = scalar_select %p344, %s23, 0
      %s346 = scalar_lea.vmem %s2, %s345
      %s347 = smul.u32 %s21, 4
      %s348 = sadd.s32 %s347, 3
      %s349 = smul.u32 8, %s22
      %s350 = ssub.s32 9, %s349
      %p351 = scmp.lt.s32.totalorder %s350, 8
      %s352 = scalar_select %p351, %s350, 8
      %s353 = smul.u32 64, %s352
      %s354 = smul.u32 %s353, 2
      %p355 = scmp.lt.s32.totalorder %s348, 7
      %s356 = scalar_select %p355, %s348, 7
      %p357 = scmp.lt.s32.totalorder %s349, 8
      %s358 = scalar_select %p357, %s349, 8
      %s359 = smul.addr %s358, 2
      %s360 = smul.addr %s356, 18
      %s361 = sadd.s32 %s359, %s360
      %s362 = smul.addr %s361, 4
      %s363 = scalar_lea.vmem %s3, %s362
      %s364 = smul.u32 %s21, 4
      %s365 = sadd.s32 %s364, 3
      %s366 = smul.u32 8, %s22
      %s367 = ssub.s32 9, %s366
      %p368 = scmp.lt.s32.totalorder %s367, 8
      %s369 = scalar_select %p368, %s367, 8
      %s370 = smul.u32 64, %s369
      %s371 = smul.u32 %s370, 2
      %p372 = scmp.lt.s32.totalorder %s23, 0
      %s373 = scalar_select %p372, %s23, 0
      %s374 = smul.addr %s373, 2
      %s375 = scalar_lea.vmem %s4, %s374
      %s376 = smul.u32 8, %s22
      %p377 = scmp.lt.s32.totalorder %s21, 1
      %s378 = scalar_select %p377, %s21, 1
      %p379 = scmp.lt.s32.totalorder %s376, 7
      %s380 = scalar_select %p379, %s376, 7
      %p381 = scmp.lt.s32.totalorder %s23, 0
      %s382 = scalar_select %p381, %s23, 0
      %s383 = sadd.s32 %s382, %s380
      %s384 = smul.addr %s378, 8
      %s385 = sadd.s32 %s383, %s384
      %s386 = smul.addr %s385, 8
      %s387 = scalar_lea.vmem %s5, %s386
      %s388 = smul.u32 8, %s22
      %p390 = scmp.eq.s32.totalorder %s22, 0
      %p391 = scmp.eq.s32.totalorder %s23, 0
      %p392 = pnand %p390, %p391
      %p393 = pneg %p392
      // Predicated region
      $region41: #{basic_block_forward.3} parent=39 // pred_check
        _
      $region42: #{basic_block_forward.3} parent=39 // pred_check_branch
        %395 = sbr.rel (%p392) target = $region44
      $region43: #{basic_block_forward.3} parent=39 // pred_region
        %vm396 = vcmask 60416
        %397 = vst.msk [vmem:[#allocation2] sm:$0xf] %vm396, 0
        %vm398 = vcmask 57344
        %399 = vst.msk [vmem:[#allocation2 + $0x4] sm:$0x1] %vm398, 0
        %400 = vst.msk [vmem:[#allocation2 + $0x8] sm:$0xf] %vm396, 0
        %401 = vst.msk [vmem:[#allocation2 + $0xc] sm:$0x1] %vm398, 0
        %402 = vst.msk [vmem:[#allocation2 + $0x10] sm:$0xf] %vm396, 0
        %403 = vst.msk [vmem:[#allocation2 + $0x14] sm:$0x1] %vm398, 0
        %404 = vst.msk [vmem:[#allocation2 + $0x18] sm:$0xf] %vm396, 0
        %405 = vst.msk [vmem:[#allocation2 + $0x1c] sm:$0x1] %vm398, 0
        %406 = vst.msk [vmem:[#allocation2 + $0x20] sm:$0xf] %vm396, 0
        %407 = vst.msk [vmem:[#allocation2 + $0x24] sm:$0x1] %vm398, 0
        %408 = vst.msk [vmem:[#allocation2 + $0x28] sm:$0xf] %vm396, 0
        %409 = vst.msk [vmem:[#allocation2 + $0x2c] sm:$0x1] %vm398, 0
        %410 = vst.msk [vmem:[#allocation2 + $0x30] sm:$0xf] %vm396, 0
        %411 = vst.msk [vmem:[#allocation2 + $0x34] sm:$0x1] %vm398, 0
        %412 = vst.msk [vmem:[#allocation2 + $0x38] sm:$0xf] %vm396, 0
        %413 = vst.msk [vmem:[#allocation2 + $0x3c] sm:$0x1] %vm398, 0
        %414 = vst.msk [vmem:[#allocation2 + $0x40] sm:$0xf] %vm396, 0
        %415 = vst.msk [vmem:[#allocation2 + $0x44] sm:$0x1] %vm398, 0
        %416 = vst.msk [vmem:[#allocation2 + $0x48] sm:$0xf] %vm396, 0
        %417 = vst.msk [vmem:[#allocation2 + $0x4c] sm:$0x1] %vm398, 0
        %v418 = vld [vmem:[%s339] sm:$0xf]
        %v419 = vld [vmem:[%s339 + $0x4] sm:$0xf]
        %v420 = vld [vmem:[%s339 + $0x8] sm:$0xf]
        %v421 = vld [vmem:[%s339 + $0xc] sm:$0xf]
        %v422 = vld [vmem:[%s339 + $0x10] sm:$0xf]
        %v423 = vld [vmem:[%s339 + $0x14] sm:$0xf]
        %v424 = vld [vmem:[%s339 + $0x18] sm:$0xf]
        %v425 = vld [vmem:[%s339 + $0x1c] sm:$0xf]
        %v427 = vshrl.u32 %v418, 16
        %v429 = vrot.slane %v427, 7
        %v430 = vshll.u32 %v418, 16
        %v432 = vor.u32 %v429, %v430
        %v433 = vrot.slane %v429, 4
        %v435 = vshrl.u32 %v419, 16
        %v437 = vrot.slane %v435, 7
        %v438 = vshll.u32 %v419, 16
        %v440 = vor.u32 %v437, %v438
        %v441 = vrot.slane %v437, 4
        %v443 = vshrl.u32 %v420, 16
        %v445 = vrot.slane %v443, 7
        %v446 = vshll.u32 %v420, 16
        %v448 = vor.u32 %v445, %v446
        %v449 = vrot.slane %v445, 4
        %v451 = vshrl.u32 %v421, 16
        %v453 = vrot.slane %v451, 7
        %v454 = vshll.u32 %v421, 16
        %v456 = vor.u32 %v453, %v454
        %v457 = vrot.slane %v453, 4
        %v459 = vshrl.u32 %v422, 16
        %v461 = vrot.slane %v459, 7
        %v462 = vshll.u32 %v422, 16
        %v464 = vor.u32 %v461, %v462
        %v465 = vrot.slane %v461, 4
        %v467 = vshrl.u32 %v423, 16
        %v469 = vrot.slane %v467, 7
        %v470 = vshll.u32 %v423, 16
        %v472 = vor.u32 %v469, %v470
        %v473 = vrot.slane %v469, 4
        %v475 = vshrl.u32 %v424, 16
        %v477 = vrot.slane %v475, 7
        %v478 = vshll.u32 %v424, 16
        %v480 = vor.u32 %v477, %v478
        %v481 = vrot.slane %v477, 4
        %v483 = vshrl.u32 %v425, 16
        %v485 = vrot.slane %v483, 7
        %v486 = vshll.u32 %v425, 16
        %v488 = vor.u32 %v485, %v486
        %v489 = vrot.slane %v485, 4
        %s506 = scalar_lea.vmem [#allocation2], 8
        %vm507 = vcmask 60416
        %vm508 = vsmask.f32 7938
        %vm509 = vmand %vm507, %vm508
        %v510 = vld [vmem:[%s506] sm:$0xf]
        %v511 = vsel %vm509, %v432, %v510
        %512 = vst [vmem:[%s506] sm:$0xf] %v511
        %vm513 = vcmask 57344
        %vm514 = vsmask.f32 256
        %vm515 = vmand %vm513, %vm514
        %v516 = vld [vmem:[%s506 + $0x4] sm:$0x1]
        %v517 = vsel %vm515, %v433, %v516
        %518 = vst [vmem:[%s506 + $0x4] sm:$0x1] %v517
        %v519 = vld [vmem:[%s506 + $0x8] sm:$0xf]
        %v520 = vsel %vm509, %v440, %v519
        %521 = vst [vmem:[%s506 + $0x8] sm:$0xf] %v520
        %v522 = vld [vmem:[%s506 + $0xc] sm:$0x1]
        %v523 = vsel %vm515, %v441, %v522
        %524 = vst [vmem:[%s506 + $0xc] sm:$0x1] %v523
        %v525 = vld [vmem:[%s506 + $0x10] sm:$0xf]
        %v526 = vsel %vm509, %v448, %v525
        %527 = vst [vmem:[%s506 + $0x10] sm:$0xf] %v526
        %v528 = vld [vmem:[%s506 + $0x14] sm:$0x1]
        %v529 = vsel %vm515, %v449, %v528
        %530 = vst [vmem:[%s506 + $0x14] sm:$0x1] %v529
        %v531 = vld [vmem:[%s506 + $0x18] sm:$0xf]
        %v532 = vsel %vm509, %v456, %v531
        %533 = vst [vmem:[%s506 + $0x18] sm:$0xf] %v532
        %v534 = vld [vmem:[%s506 + $0x1c] sm:$0x1]
        %v535 = vsel %vm515, %v457, %v534
        %536 = vst [vmem:[%s506 + $0x1c] sm:$0x1] %v535
        %v537 = vld [vmem:[%s506 + $0x20] sm:$0xf]
        %v538 = vsel %vm509, %v464, %v537
        %539 = vst [vmem:[%s506 + $0x20] sm:$0xf] %v538
        %v540 = vld [vmem:[%s506 + $0x24] sm:$0x1]
        %v541 = vsel %vm515, %v465, %v540
        %542 = vst [vmem:[%s506 + $0x24] sm:$0x1] %v541
        %v543 = vld [vmem:[%s506 + $0x28] sm:$0xf]
        %v544 = vsel %vm509, %v472, %v543
        %545 = vst [vmem:[%s506 + $0x28] sm:$0xf] %v544
        %v546 = vld [vmem:[%s506 + $0x2c] sm:$0x1]
        %v547 = vsel %vm515, %v473, %v546
        %548 = vst [vmem:[%s506 + $0x2c] sm:$0x1] %v547
        %v549 = vld [vmem:[%s506 + $0x30] sm:$0xf]
        %v550 = vsel %vm509, %v480, %v549
        %551 = vst [vmem:[%s506 + $0x30] sm:$0xf] %v550
        %v552 = vld [vmem:[%s506 + $0x34] sm:$0x1]
        %v553 = vsel %vm515, %v481, %v552
        %554 = vst [vmem:[%s506 + $0x34] sm:$0x1] %v553
        %v555 = vld [vmem:[%s506 + $0x38] sm:$0xf]
        %v556 = vsel %vm509, %v488, %v555
        %557 = vst [vmem:[%s506 + $0x38] sm:$0xf] %v556
        %v558 = vld [vmem:[%s506 + $0x3c] sm:$0x1]
        %v559 = vsel %vm515, %v489, %v558
        %560 = vst [vmem:[%s506 + $0x3c] sm:$0x1] %v559
      $region44: #{basic_block_forward.3} parent=39 // pred_fallthru
        _
      %s561 = smul.u32 %s22, 8
      %s562 = smul.u32 %s561, 2
      %s563 = smul.addr %s562, 4
      %s564 = scalar_lea.vmem [#allocation2], %s563
      %v565 = vld [vmem:[%s564] sm:$0xf]
      %v566 = vld [vmem:[%s564 + $0x4] sm:$0x1]
      %v567 = vld [vmem:[%s564 + $0x8] sm:$0xf]
      %v568 = vld [vmem:[%s564 + $0xc] sm:$0x1]
      %v569 = vld [vmem:[%s564 + $0x10] sm:$0xf]
      %v570 = vld [vmem:[%s564 + $0x14] sm:$0x1]
      %v571 = vld [vmem:[%s564 + $0x18] sm:$0xf]
      %v572 = vld [vmem:[%s564 + $0x1c] sm:$0x1]
      %v573 = vld [vmem:[%s564 + $0x20] sm:$0xf]
      %v574 = vld [vmem:[%s564 + $0x24] sm:$0x1]
      %v575 = vld [vmem:[%s564 + $0x28] sm:$0xf]
      %v576 = vld [vmem:[%s564 + $0x2c] sm:$0x1]
      %v577 = vld [vmem:[%s564 + $0x30] sm:$0xf]
      %v578 = vld [vmem:[%s564 + $0x34] sm:$0x1]
      %v579 = vld [vmem:[%s564 + $0x38] sm:$0xf]
      %v580 = vld [vmem:[%s564 + $0x3c] sm:$0x1]
      %s581 = sadd.s32 %s561, 1
      %s582 = smul.u32 %s581, 2
      %s583 = smul.addr %s582, 4
      %s584 = scalar_lea.vmem [#allocation2], %s583
      %v585 = vld [vmem:[%s584] sm:$0xf]
      %v586 = vld [vmem:[%s584 + $0x4] sm:$0x1]
      %v587 = vld [vmem:[%s584 + $0x8] sm:$0xf]
      %v588 = vld [vmem:[%s584 + $0xc] sm:$0x1]
      %v589 = vld [vmem:[%s584 + $0x10] sm:$0xf]
      %v590 = vld [vmem:[%s584 + $0x14] sm:$0x1]
      %v591 = vld [vmem:[%s584 + $0x18] sm:$0xf]
      %v592 = vld [vmem:[%s584 + $0x1c] sm:$0x1]
      %v593 = vld [vmem:[%s584 + $0x20] sm:$0xf]
      %v594 = vld [vmem:[%s584 + $0x24] sm:$0x1]
      %v595 = vld [vmem:[%s584 + $0x28] sm:$0xf]
      %v596 = vld [vmem:[%s584 + $0x2c] sm:$0x1]
      %v597 = vld [vmem:[%s584 + $0x30] sm:$0xf]
      %v598 = vld [vmem:[%s584 + $0x34] sm:$0x1]
      %v599 = vld [vmem:[%s584 + $0x38] sm:$0xf]
      %v600 = vld [vmem:[%s584 + $0x3c] sm:$0x1]
      %s601 = sadd.s32 %s561, 2
      %s602 = smul.u32 %s601, 2
      %s603 = smul.addr %s602, 4
      %s604 = scalar_lea.vmem [#allocation2], %s603
      %v605 = vld [vmem:[%s604] sm:$0xf]
      %v606 = vld [vmem:[%s604 + $0x4] sm:$0x1]
      %v607 = vld [vmem:[%s604 + $0x8] sm:$0xf]
      %v608 = vld [vmem:[%s604 + $0xc] sm:$0x1]
      %v609 = vld [vmem:[%s604 + $0x10] sm:$0xf]
      %v610 = vld [vmem:[%s604 + $0x14] sm:$0x1]
      %v611 = vld [vmem:[%s604 + $0x18] sm:$0xf]
      %v612 = vld [vmem:[%s604 + $0x1c] sm:$0x1]
      %v613 = vld [vmem:[%s604 + $0x20] sm:$0xf]
      %v614 = vld [vmem:[%s604 + $0x24] sm:$0x1]
      %v615 = vld [vmem:[%s604 + $0x28] sm:$0xf]
      %v616 = vld [vmem:[%s604 + $0x2c] sm:$0x1]
      %v617 = vld [vmem:[%s604 + $0x30] sm:$0xf]
      %v618 = vld [vmem:[%s604 + $0x34] sm:$0x1]
      %v619 = vld [vmem:[%s604 + $0x38] sm:$0xf]
      %v620 = vld [vmem:[%s604 + $0x3c] sm:$0x1]
      %v637 = vunpack.c.l.b16 %v565
      %v638 = vunpack.c.l.b16 %v566
      %v639 = vunpack.c.l.b16 %v567
      %v640 = vunpack.c.l.b16 %v568
      %v641 = vunpack.c.l.b16 %v569
      %v642 = vunpack.c.l.b16 %v570
      %v643 = vunpack.c.l.b16 %v571
      %v644 = vunpack.c.l.b16 %v572
      %v645 = vunpack.c.l.b16 %v573
      %v646 = vunpack.c.l.b16 %v574
      %v647 = vunpack.c.l.b16 %v575
      %v648 = vunpack.c.l.b16 %v576
      %v649 = vunpack.c.l.b16 %v577
      %v650 = vunpack.c.l.b16 %v578
      %v651 = vunpack.c.l.b16 %v579
      %v652 = vunpack.c.l.b16 %v580
      %v653 = vpack.c.b16 %v638, %v637
      %v654 = vpack.c.b16 %v640, %v639
      %v655 = vpack.c.b16 %v642, %v641
      %v656 = vpack.c.b16 %v644, %v643
      %v657 = vpack.c.b16 %v646, %v645
      %v658 = vpack.c.b16 %v648, %v647
      %v659 = vpack.c.b16 %v650, %v649
      %v660 = vpack.c.b16 %v652, %v651
      %v662 = vshrl.u32 %v653, 16
      %v664 = vshll.u32 %v653, 16
      %v666 = vrot.slane %v664, 1
      %v667 = vor.u32 %v662, %v666
      %v669 = vshrl.u32 %v654, 16
      %v671 = vshll.u32 %v654, 16
      %v673 = vrot.slane %v671, 1
      %v674 = vor.u32 %v669, %v673
      %v676 = vshrl.u32 %v655, 16
      %v678 = vshll.u32 %v655, 16
      %v680 = vrot.slane %v678, 1
      %v681 = vor.u32 %v676, %v680
      %v683 = vshrl.u32 %v656, 16
      %v685 = vshll.u32 %v656, 16
      %v687 = vrot.slane %v685, 1
      %v688 = vor.u32 %v683, %v687
      %v690 = vshrl.u32 %v657, 16
      %v692 = vshll.u32 %v657, 16
      %v694 = vrot.slane %v692, 1
      %v695 = vor.u32 %v690, %v694
      %v697 = vshrl.u32 %v658, 16
      %v699 = vshll.u32 %v658, 16
      %v701 = vrot.slane %v699, 1
      %v702 = vor.u32 %v697, %v701
      %v704 = vshrl.u32 %v659, 16
      %v706 = vshll.u32 %v659, 16
      %v708 = vrot.slane %v706, 1
      %v709 = vor.u32 %v704, %v708
      %v711 = vshrl.u32 %v660, 16
      %v713 = vshll.u32 %v660, 16
      %v715 = vrot.slane %v713, 1
      %v716 = vor.u32 %v711, %v715
      %717 = vrot.lane.b32.xlu0 %v667, 8
      %v718 = vpop.permute.xlu0 %717
      %719 = vrot.lane.b32.xlu0 %v674, 8
      %v720 = vpop.permute.xlu0 %719
      %721 = vrot.lane.b32.xlu0 %v681, 8
      %v722 = vpop.permute.xlu0 %721
      %723 = vrot.lane.b32.xlu0 %v688, 8
      %v724 = vpop.permute.xlu0 %723
      %725 = vrot.lane.b32.xlu0 %v695, 8
      %v726 = vpop.permute.xlu0 %725
      %727 = vrot.lane.b32.xlu0 %v702, 8
      %v728 = vpop.permute.xlu0 %727
      %729 = vrot.lane.b32.xlu0 %v709, 8
      %v730 = vpop.permute.xlu0 %729
      %731 = vrot.lane.b32.xlu0 %v716, 8
      %v732 = vpop.permute.xlu0 %731
      %v733 = vrot.slane %v653, 1
      %v734 = vrot.slane %v654, 1
      %v735 = vrot.slane %v655, 1
      %v736 = vrot.slane %v656, 1
      %v737 = vrot.slane %v657, 1
      %v738 = vrot.slane %v658, 1
      %v739 = vrot.slane %v659, 1
      %v740 = vrot.slane %v660, 1
      %741 = vrot.lane.b32.xlu0 %v733, 16
      %v742 = vpop.permute.xlu0 %741
      %743 = vrot.lane.b32.xlu0 %v734, 16
      %v744 = vpop.permute.xlu0 %743
      %745 = vrot.lane.b32.xlu0 %v735, 16
      %v746 = vpop.permute.xlu0 %745
      %747 = vrot.lane.b32.xlu0 %v736, 16
      %v748 = vpop.permute.xlu0 %747
      %749 = vrot.lane.b32.xlu0 %v737, 16
      %v750 = vpop.permute.xlu0 %749
      %751 = vrot.lane.b32.xlu0 %v738, 16
      %v752 = vpop.permute.xlu0 %751
      %753 = vrot.lane.b32.xlu0 %v739, 16
      %v754 = vpop.permute.xlu0 %753
      %755 = vrot.lane.b32.xlu0 %v740, 16
      %v756 = vpop.permute.xlu0 %755
      %v765 = vunpack.c.l.b16 %v585
      %v766 = vunpack.c.l.b16 %v587
      %v767 = vunpack.c.l.b16 %v589
      %v768 = vunpack.c.l.b16 %v591
      %v769 = vunpack.c.l.b16 %v593
      %v770 = vunpack.c.l.b16 %v595
      %v771 = vunpack.c.l.b16 %v597
      %v772 = vunpack.c.l.b16 %v599
      %v773 = vpack.c.b16 %v765, %v765
      %v774 = vpack.c.b16 %v766, %v766
      %v775 = vpack.c.b16 %v767, %v767
      %v776 = vpack.c.b16 %v768, %v768
      %v777 = vpack.c.b16 %v769, %v769
      %v778 = vpack.c.b16 %v770, %v770
      %v779 = vpack.c.b16 %v771, %v771
      %v780 = vpack.c.b16 %v772, %v772
      %781 = vrot.lane.b32.xlu0 %v773, 24
      %v782 = vpop.permute.xlu0 %781
      %783 = vrot.lane.b32.xlu0 %v774, 24
      %v784 = vpop.permute.xlu0 %783
      %785 = vrot.lane.b32.xlu0 %v775, 24
      %v786 = vpop.permute.xlu0 %785
      %787 = vrot.lane.b32.xlu0 %v776, 24
      %v788 = vpop.permute.xlu0 %787
      %789 = vrot.lane.b32.xlu0 %v777, 24
      %v790 = vpop.permute.xlu0 %789
      %791 = vrot.lane.b32.xlu0 %v778, 24
      %v792 = vpop.permute.xlu0 %791
      %793 = vrot.lane.b32.xlu0 %v779, 24
      %v794 = vpop.permute.xlu0 %793
      %795 = vrot.lane.b32.xlu0 %v780, 24
      %v796 = vpop.permute.xlu0 %795
      %v805 = vunpack.c.l.b16 %v586
      %v806 = vunpack.c.l.b16 %v588
      %v807 = vunpack.c.l.b16 %v590
      %v808 = vunpack.c.l.b16 %v592
      %v809 = vunpack.c.l.b16 %v594
      %v810 = vunpack.c.l.b16 %v596
      %v811 = vunpack.c.l.b16 %v598
      %v812 = vunpack.c.l.b16 %v600
      %v813 = vpack.c.b16 %v805, %v765
      %v814 = vpack.c.b16 %v806, %v766
      %v815 = vpack.c.b16 %v807, %v767
      %v816 = vpack.c.b16 %v808, %v768
      %v817 = vpack.c.b16 %v809, %v769
      %v818 = vpack.c.b16 %v810, %v770
      %v819 = vpack.c.b16 %v811, %v771
      %v820 = vpack.c.b16 %v812, %v772
      %v822 = vshrl.u32 %v813, 16
      %v824 = vshll.u32 %v813, 16
      %v826 = vrot.slane %v824, 1
      %v827 = vor.u32 %v822, %v826
      %v829 = vshrl.u32 %v814, 16
      %v831 = vshll.u32 %v814, 16
      %v833 = vrot.slane %v831, 1
      %v834 = vor.u32 %v829, %v833
      %v836 = vshrl.u32 %v815, 16
      %v838 = vshll.u32 %v815, 16
      %v840 = vrot.slane %v838, 1
      %v841 = vor.u32 %v836, %v840
      %v843 = vshrl.u32 %v816, 16
      %v845 = vshll.u32 %v816, 16
      %v847 = vrot.slane %v845, 1
      %v848 = vor.u32 %v843, %v847
      %v850 = vshrl.u32 %v817, 16
      %v852 = vshll.u32 %v817, 16
      %v854 = vrot.slane %v852, 1
      %v855 = vor.u32 %v850, %v854
      %v857 = vshrl.u32 %v818, 16
      %v859 = vshll.u32 %v818, 16
      %v861 = vrot.slane %v859, 1
      %v862 = vor.u32 %v857, %v861
      %v864 = vshrl.u32 %v819, 16
      %v866 = vshll.u32 %v819, 16
      %v868 = vrot.slane %v866, 1
      %v869 = vor.u32 %v864, %v868
      %v871 = vshrl.u32 %v820, 16
      %v873 = vshll.u32 %v820, 16
      %v875 = vrot.slane %v873, 1
      %v876 = vor.u32 %v871, %v875
      %877 = vrot.lane.b32.xlu0 %v827, 32
      %v878 = vpop.permute.xlu0 %877
      %879 = vrot.lane.b32.xlu0 %v834, 32
      %v880 = vpop.permute.xlu0 %879
      %881 = vrot.lane.b32.xlu0 %v841, 32
      %v882 = vpop.permute.xlu0 %881
      %883 = vrot.lane.b32.xlu0 %v848, 32
      %v884 = vpop.permute.xlu0 %883
      %885 = vrot.lane.b32.xlu0 %v855, 32
      %v886 = vpop.permute.xlu0 %885
      %887 = vrot.lane.b32.xlu0 %v862, 32
      %v888 = vpop.permute.xlu0 %887
      %889 = vrot.lane.b32.xlu0 %v869, 32
      %v890 = vpop.permute.xlu0 %889
      %891 = vrot.lane.b32.xlu0 %v876, 32
      %v892 = vpop.permute.xlu0 %891
      %v893 = vrot.slane %v813, 1
      %v894 = vrot.slane %v814, 1
      %v895 = vrot.slane %v815, 1
      %v896 = vrot.slane %v816, 1
      %v897 = vrot.slane %v817, 1
      %v898 = vrot.slane %v818, 1
      %v899 = vrot.slane %v819, 1
      %v900 = vrot.slane %v820, 1
      %901 = vrot.lane.b32.xlu0 %v893, 40
      %v902 = vpop.permute.xlu0 %901
      %903 = vrot.lane.b32.xlu0 %v894, 40
      %v904 = vpop.permute.xlu0 %903
      %905 = vrot.lane.b32.xlu0 %v895, 40
      %v906 = vpop.permute.xlu0 %905
      %907 = vrot.lane.b32.xlu0 %v896, 40
      %v908 = vpop.permute.xlu0 %907
      %909 = vrot.lane.b32.xlu0 %v897, 40
      %v910 = vpop.permute.xlu0 %909
      %911 = vrot.lane.b32.xlu0 %v898, 40
      %v912 = vpop.permute.xlu0 %911
      %913 = vrot.lane.b32.xlu0 %v899, 40
      %v914 = vpop.permute.xlu0 %913
      %915 = vrot.lane.b32.xlu0 %v900, 40
      %v916 = vpop.permute.xlu0 %915
      %v925 = vunpack.c.l.b16 %v605
      %v926 = vunpack.c.l.b16 %v607
      %v927 = vunpack.c.l.b16 %v609
      %v928 = vunpack.c.l.b16 %v611
      %v929 = vunpack.c.l.b16 %v613
      %v930 = vunpack.c.l.b16 %v615
      %v931 = vunpack.c.l.b16 %v617
      %v932 = vunpack.c.l.b16 %v619
      %v933 = vpack.c.b16 %v925, %v925
      %v934 = vpack.c.b16 %v926, %v926
      %v935 = vpack.c.b16 %v927, %v927
      %v936 = vpack.c.b16 %v928, %v928
      %v937 = vpack.c.b16 %v929, %v929
      %v938 = vpack.c.b16 %v930, %v930
      %v939 = vpack.c.b16 %v931, %v931
      %v940 = vpack.c.b16 %v932, %v932
      %941 = vrot.lane.b32.xlu0 %v933, 48
      %v942 = vpop.permute.xlu0 %941
      %943 = vrot.lane.b32.xlu0 %v934, 48
      %v944 = vpop.permute.xlu0 %943
      %945 = vrot.lane.b32.xlu0 %v935, 48
      %v946 = vpop.permute.xlu0 %945
      %947 = vrot.lane.b32.xlu0 %v936, 48
      %v948 = vpop.permute.xlu0 %947
      %949 = vrot.lane.b32.xlu0 %v937, 48
      %v950 = vpop.permute.xlu0 %949
      %951 = vrot.lane.b32.xlu0 %v938, 48
      %v952 = vpop.permute.xlu0 %951
      %953 = vrot.lane.b32.xlu0 %v939, 48
      %v954 = vpop.permute.xlu0 %953
      %955 = vrot.lane.b32.xlu0 %v940, 48
      %v956 = vpop.permute.xlu0 %955
      %v965 = vunpack.c.l.b16 %v606
      %v966 = vunpack.c.l.b16 %v608
      %v967 = vunpack.c.l.b16 %v610
      %v968 = vunpack.c.l.b16 %v612
      %v969 = vunpack.c.l.b16 %v614
      %v970 = vunpack.c.l.b16 %v616
      %v971 = vunpack.c.l.b16 %v618
      %v972 = vunpack.c.l.b16 %v620
      %v973 = vpack.c.b16 %v965, %v925
      %v974 = vpack.c.b16 %v966, %v926
      %v975 = vpack.c.b16 %v967, %v927
      %v976 = vpack.c.b16 %v968, %v928
      %v977 = vpack.c.b16 %v969, %v929
      %v978 = vpack.c.b16 %v970, %v930
      %v979 = vpack.c.b16 %v971, %v931
      %v980 = vpack.c.b16 %v972, %v932
      %v982 = vshrl.u32 %v973, 16
      %v984 = vshll.u32 %v973, 16
      %v986 = vrot.slane %v984, 1
      %v987 = vor.u32 %v982, %v986
      %v989 = vshrl.u32 %v974, 16
      %v991 = vshll.u32 %v974, 16
      %v993 = vrot.slane %v991, 1
      %v994 = vor.u32 %v989, %v993
      %v996 = vshrl.u32 %v975, 16
      %v998 = vshll.u32 %v975, 16
      %v1000 = vrot.slane %v998, 1
      %v1001 = vor.u32 %v996, %v1000
      %v1003 = vshrl.u32 %v976, 16
      %v1005 = vshll.u32 %v976, 16
      %v1007 = vrot.slane %v1005, 1
      %v1008 = vor.u32 %v1003, %v1007
      %v1010 = vshrl.u32 %v977, 16
      %v1012 = vshll.u32 %v977, 16
      %v1014 = vrot.slane %v1012, 1
      %v1015 = vor.u32 %v1010, %v1014
      %v1017 = vshrl.u32 %v978, 16
      %v1019 = vshll.u32 %v978, 16
      %v1021 = vrot.slane %v1019, 1
      %v1022 = vor.u32 %v1017, %v1021
      %v1024 = vshrl.u32 %v979, 16
      %v1026 = vshll.u32 %v979, 16
      %v1028 = vrot.slane %v1026, 1
      %v1029 = vor.u32 %v1024, %v1028
      %v1031 = vshrl.u32 %v980, 16
      %v1033 = vshll.u32 %v980, 16
      %v1035 = vrot.slane %v1033, 1
      %v1036 = vor.u32 %v1031, %v1035
      %1037 = vrot.lane.b32.xlu0 %v987, 56
      %v1038 = vpop.permute.xlu0 %1037
      %1039 = vrot.lane.b32.xlu0 %v994, 56
      %v1040 = vpop.permute.xlu0 %1039
      %1041 = vrot.lane.b32.xlu0 %v1001, 56
      %v1042 = vpop.permute.xlu0 %1041
      %1043 = vrot.lane.b32.xlu0 %v1008, 56
      %v1044 = vpop.permute.xlu0 %1043
      %1045 = vrot.lane.b32.xlu0 %v1015, 56
      %v1046 = vpop.permute.xlu0 %1045
      %1047 = vrot.lane.b32.xlu0 %v1022, 56
      %v1048 = vpop.permute.xlu0 %1047
      %1049 = vrot.lane.b32.xlu0 %v1029, 56
      %v1050 = vpop.permute.xlu0 %1049
      %1051 = vrot.lane.b32.xlu0 %v1036, 56
      %v1052 = vpop.permute.xlu0 %1051
      %v1053 = vrot.slane %v973, 1
      %v1054 = vrot.slane %v974, 1
      %v1055 = vrot.slane %v975, 1
      %v1056 = vrot.slane %v976, 1
      %v1057 = vrot.slane %v977, 1
      %v1058 = vrot.slane %v978, 1
      %v1059 = vrot.slane %v979, 1
      %v1060 = vrot.slane %v980, 1
      %1061 = vrot.lane.b32.xlu0 %v1053, 64
      %v1062 = vpop.permute.xlu0 %1061
      %1063 = vrot.lane.b32.xlu0 %v1054, 64
      %v1064 = vpop.permute.xlu0 %1063
      %1065 = vrot.lane.b32.xlu0 %v1055, 64
      %v1066 = vpop.permute.xlu0 %1065
      %1067 = vrot.lane.b32.xlu0 %v1056, 64
      %v1068 = vpop.permute.xlu0 %1067
      %1069 = vrot.lane.b32.xlu0 %v1057, 64
      %v1070 = vpop.permute.xlu0 %1069
      %1071 = vrot.lane.b32.xlu0 %v1058, 64
      %v1072 = vpop.permute.xlu0 %1071
      %1073 = vrot.lane.b32.xlu0 %v1059, 64
      %v1074 = vpop.permute.xlu0 %1073
      %1075 = vrot.lane.b32.xlu0 %v1060, 64
      %v1076 = vpop.permute.xlu0 %1075
      %vm1077 = vcmask 64512
      %v1080 = vsel %vm1077, %v565, %v718
      %v1083 = vsel %vm1077, %v567, %v720
      %v1086 = vsel %vm1077, %v569, %v722
      %v1089 = vsel %vm1077, %v571, %v724
      %v1092 = vsel %vm1077, %v573, %v726
      %v1095 = vsel %vm1077, %v575, %v728
      %v1098 = vsel %vm1077, %v577, %v730
      %v1101 = vsel %vm1077, %v579, %v732
      %vm1102 = vcmask 130048
      %v1104 = vsel %vm1102, %v1080, %v742
      %v1106 = vsel %vm1102, %v1083, %v744
      %v1108 = vsel %vm1102, %v1086, %v746
      %v1110 = vsel %vm1102, %v1089, %v748
      %v1112 = vsel %vm1102, %v1092, %v750
      %v1114 = vsel %vm1102, %v1095, %v752
      %v1116 = vsel %vm1102, %v1098, %v754
      %v1118 = vsel %vm1102, %v1101, %v756
      %vm1119 = vcmask 195584
      %v1121 = vsel %vm1119, %v1104, %v782
      %v1123 = vsel %vm1119, %v1106, %v784
      %v1125 = vsel %vm1119, %v1108, %v786
      %v1127 = vsel %vm1119, %v1110, %v788
      %v1129 = vsel %vm1119, %v1112, %v790
      %v1131 = vsel %vm1119, %v1114, %v792
      %v1133 = vsel %vm1119, %v1116, %v794
      %v1135 = vsel %vm1119, %v1118, %v796
      %vm1136 = vcmask 261120
      %v1138 = vsel %vm1136, %v1121, %v878
      %v1140 = vsel %vm1136, %v1123, %v880
      %v1142 = vsel %vm1136, %v1125, %v882
      %v1144 = vsel %vm1136, %v1127, %v884
      %v1146 = vsel %vm1136, %v1129, %v886
      %v1148 = vsel %vm1136, %v1131, %v888
      %v1150 = vsel %vm1136, %v1133, %v890
      %v1152 = vsel %vm1136, %v1135, %v892
      %vm1153 = vcmask 326656
      %v1155 = vsel %vm1153, %v1138, %v902
      %v1157 = vsel %vm1153, %v1140, %v904
      %v1159 = vsel %vm1153, %v1142, %v906
      %v1161 = vsel %vm1153, %v1144, %v908
      %v1163 = vsel %vm1153, %v1146, %v910
      %v1165 = vsel %vm1153, %v1148, %v912
      %v1167 = vsel %vm1153, %v1150, %v914
      %v1169 = vsel %vm1153, %v1152, %v916
      %vm1170 = vcmask 392192
      %v1172 = vsel %vm1170, %v1155, %v942
      %v1174 = vsel %vm1170, %v1157, %v944
      %v1176 = vsel %vm1170, %v1159, %v946
      %v1178 = vsel %vm1170, %v1161, %v948
      %v1180 = vsel %vm1170, %v1163, %v950
      %v1182 = vsel %vm1170, %v1165, %v952
      %v1184 = vsel %vm1170, %v1167, %v954
      %v1186 = vsel %vm1170, %v1169, %v956
      %vm1187 = vcmask 457728
      %v1189 = vsel %vm1187, %v1172, %v1038
      %v1191 = vsel %vm1187, %v1174, %v1040
      %v1193 = vsel %vm1187, %v1176, %v1042
      %v1195 = vsel %vm1187, %v1178, %v1044
      %v1197 = vsel %vm1187, %v1180, %v1046
      %v1199 = vsel %vm1187, %v1182, %v1048
      %v1201 = vsel %vm1187, %v1184, %v1050
      %v1203 = vsel %vm1187, %v1186, %v1052
      %vm1204 = vcmask 523264
      %v1206 = vsel %vm1204, %v1189, %v1062
      %v1208 = vsel %vm1204, %v1191, %v1064
      %v1210 = vsel %vm1204, %v1193, %v1066
      %v1212 = vsel %vm1204, %v1195, %v1068
      %v1214 = vsel %vm1204, %v1197, %v1070
      %v1216 = vsel %vm1204, %v1199, %v1072
      %v1218 = vsel %vm1204, %v1201, %v1074
      %v1220 = vsel %vm1204, %v1203, %v1076
      %v1221 = vld [vmem:[%s343] sm:$0xf]
      %v1222 = vld [vmem:[%s343 + $0x4] sm:$0xf]
      %v1223 = vld [vmem:[%s343 + $0x8] sm:$0xf]
      %v1224 = vld [vmem:[%s343 + $0xc] sm:$0xf]
      %v1225 = vld [vmem:[%s343 + $0x10] sm:$0xf]
      %v1226 = vld [vmem:[%s343 + $0x14] sm:$0xf]
      %v1227 = vld [vmem:[%s343 + $0x18] sm:$0xf]
      %v1228 = vld [vmem:[%s343 + $0x1c] sm:$0xf]
      %v1229 = vld [vmem:[%s343 + $0x20] sm:$0xf]
      %v1230 = vld [vmem:[%s346] sm:$0x1]
      %v1232 = vlaneseq
      %v1233 = vshrl.u32 %v1232, 7
      %v1234 = vsub.s32 0, %v1233
      %v1235 = vrot.slane %v1230, %v1234
      %v1245 = vunpack.c.l.b16 %v1206
      %v1246 = vunpack.c.l.b16 %v1208
      %v1247 = vunpack.c.l.b16 %v1210
      %v1248 = vunpack.c.l.b16 %v1212
      %v1249 = vunpack.c.l.b16 %v1214
      %v1250 = vunpack.c.l.b16 %v1216
      %v1251 = vunpack.c.l.b16 %v1218
      %v1252 = vunpack.c.l.b16 %v1220
      %v1253 = vpack.c.b16 %v1246, %v1245
      %v1254 = vpack.c.b16 %v1248, %v1247
      %v1255 = vpack.c.b16 %v1250, %v1249
      %v1256 = vpack.c.b16 %v1252, %v1251
      %v1266 = vunpack.c.l.b16 %v1221
      %v1267 = vunpack.c.l.b16 %v1222
      %v1268 = vunpack.c.l.b16 %v1223
      %v1269 = vunpack.c.l.b16 %v1224
      %v1270 = vunpack.c.l.b16 %v1225
      %v1271 = vunpack.c.l.b16 %v1226
      %v1272 = vunpack.c.l.b16 %v1227
      %v1273 = vunpack.c.l.b16 %v1228
      %v1274 = vunpack.c.l.b16 %v1229
      %v1275 = vpack.c.b16 %v1267, %v1266
      %v1276 = vpack.c.b16 %v1269, %v1268
      %v1277 = vpack.c.b16 %v1271, %v1270
      %v1278 = vpack.c.b16 %v1273, %v1272
      %v1279 = vpack.c.b16 %v1274, %v1274
      %vm1284 = vcmask 588800
      %v1286 = vsel %vm1284, %v1253, 0
      %v1289 = vsel %vm1284, %v1254, 0
      %v1292 = vsel %vm1284, %v1255, 0
      %v1295 = vsel %vm1284, %v1256, 0
      %vm1297 = vcmask 1043456
      %v1299 = vsel %vm1297, %v1279, 0
      %1301 = vmatprep.subr.bf16.mxu0 0
      %1302 = vmatpush1.bf16.msra.mxu0 %v1275
      %1303 = vmatprep.subr.bf16.mxu0 0
      %1304 = vmatpush1.bf16.msra.mxu0 %v1276
      %1305 = vmatprep.subr.bf16.mxu0 0
      %1306 = vmatpush1.bf16.msra.mxu0 %v1277
      %1307 = vmatprep.subr.bf16.mxu0 0
      %1308 = vmatpush1.bf16.msra.mxu0 %v1278
      %1309 = vmatprep.subr.bf16.mxu0 0
      %1310 = vmatpush1.bf16.msra.mxu0 %v1299
      %1311 = vmatprep.subr.bf16.mxu0 0
      %1312 = vmatpush1.bf16.msra.mxu0 0
      %1313 = vmatprep.subr.bf16.mxu0 0
      %1314 = vmatpush1.bf16.msra.mxu0 0
      %1315 = vmatprep.subr.bf16.mxu0 0
      %1316 = vmatpush1.bf16.msra.mxu0 0
      %1317 = vmatprep.subr.bf16.mxu0 0
      %1318 = vmatpush1.bf16.msra.mxu0 0
      %1319 = vmatprep.subr.bf16.mxu0 0
      %1320 = vmatpush1.bf16.msra.mxu0 0
      %1321 = vmatprep.subr.bf16.mxu0 0
      %1322 = vmatpush1.bf16.msra.mxu0 0
      %1323 = vmatprep.subr.bf16.mxu0 0
      %1324 = vmatpush1.bf16.msra.mxu0 0
      %1325 = vmatprep.subr.bf16.mxu0 0
      %1326 = vmatpush1.bf16.msra.mxu0 0
      %1327 = vmatprep.subr.bf16.mxu0 0
      %1328 = vmatpush1.bf16.msra.mxu0 0
      %1329 = vmatprep.subr.bf16.mxu0 0
      %1330 = vmatpush1.bf16.msra.mxu0 0
      %1331 = vmatprep.subr.bf16.mxu0 0
      %1332 = vmatpush1.bf16.msra.mxu0 0
      %1333 = vmatprep.mubr.bf16.mxu0 0
      %1334 = vmatmul.mubr.bf16.gmra.mrb[0].mxu0 %v1286
      %v1335 = vpop.f32.mrb[0].mxu0
      %v1336 = vadd.f32 %v1235, %v1335
      %v1337 = vpop.f32.mrb[0].mxu0
      %v1338 = vpop.f32.mrb[0].mxu0
      %v1339 = vadd.f32 %v1235, %v1338
      %v1340 = vpop.f32.mrb[0].mxu0
      %1341 = vmatprep.mubr.bf16.mxu0 0
      %1342 = vmatmul.mubr.bf16.gmra.mrb[0].mxu0 %v1289
      %v1343 = vpop.f32.mrb[0].mxu0
      %v1344 = vadd.f32 %v1235, %v1343
      %v1345 = vpop.f32.mrb[0].mxu0
      %v1346 = vpop.f32.mrb[0].mxu0
      %v1347 = vadd.f32 %v1235, %v1346
      %v1348 = vpop.f32.mrb[0].mxu0
      %1349 = vmatprep.mubr.bf16.mxu0 0
      %1350 = vmatmul.mubr.bf16.gmra.mrb[0].mxu0 %v1292
      %v1351 = vpop.f32.mrb[0].mxu0
      %v1352 = vadd.f32 %v1235, %v1351
      %v1353 = vpop.f32.mrb[0].mxu0
      %v1354 = vpop.f32.mrb[0].mxu0
      %v1355 = vadd.f32 %v1235, %v1354
      %v1356 = vpop.f32.mrb[0].mxu0
      %1357 = vmatprep.mubr.bf16.mxu0 0
      %1358 = vmatmul.mubr.bf16.gmra.mrb[0].mxu0 %v1295
      %v1359 = vpop.f32.mrb[0].mxu0
      %v1360 = vadd.f32 %v1235, %v1359
      %v1361 = vpop.f32.mrb[0].mxu0
      %v1362 = vpop.f32.mrb[0].mxu0
      %v1363 = vadd.f32 %v1235, %v1362
      %v1364 = vpop.f32.mrb[0].mxu0
      %1365 = vdwg.mxu0
      %v1366 = vld [vmem:[%s363] sm:$0xf]
      %v1367 = vld [vmem:[%s363 + $0x8] sm:$0xf]
      %v1368 = vld [vmem:[%s363 + $0x10] sm:$0xf]
      %v1369 = vld [vmem:[%s363 + $0x18] sm:$0xf]
      %v1370 = vld [vmem:[%s363 + $0x20] sm:$0xf]
      %v1371 = vld [vmem:[%s363 + $0x28] sm:$0xf]
      %v1372 = vld [vmem:[%s363 + $0x30] sm:$0xf]
      %v1373 = vld [vmem:[%s363 + $0x38] sm:$0xf]
      %v1374 = vld [vmem:[%s375] sm:$0x3]
      %v1383 = vunpack.c.l.b16 %v1366
      %v1384 = vunpack.c.l.b16 %v1367
      %v1385 = vunpack.c.l.b16 %v1368
      %v1386 = vunpack.c.l.b16 %v1369
      %v1387 = vunpack.c.l.b16 %v1370
      %v1388 = vunpack.c.l.b16 %v1371
      %v1389 = vunpack.c.l.b16 %v1372
      %v1390 = vunpack.c.l.b16 %v1373
      %v1391 = vpack.c.b16 %v1384, %v1383
      %v1392 = vpack.c.b16 %v1386, %v1385
      %v1393 = vpack.c.b16 %v1388, %v1387
      %v1394 = vpack.c.b16 %v1390, %v1389
      %vm1395 = vcmask 31744
      %v1397 = vsel %vm1395, %v1391, 0
      %v1400 = vsel %vm1395, %v1392, 0
      %v1403 = vsel %vm1395, %v1393, 0
      %v1406 = vsel %vm1395, %v1394, 0
      %vm1408 = vcmask 1041408
      %v1410 = vsel %vm1408, %v1374, 0
      %1412 = vmatprep.subr.bf16.mxu0 0
      %1413 = vmatpush1.bf16.msra.mxu0 %v1410
      %1414 = vmatprep.subr.bf16.mxu0 0
      %1415 = vmatpush1.bf16.msra.mxu0 0
      %1416 = vmatprep.subr.bf16.mxu0 0
      %1417 = vmatpush1.bf16.msra.mxu0 0
      %1418 = vmatprep.subr.bf16.mxu0 0
      %1419 = vmatpush1.bf16.msra.mxu0 0
      %1420 = vmatprep.subr.bf16.mxu0 0
      %1421 = vmatpush1.bf16.msra.mxu0 0
      %1422 = vmatprep.subr.bf16.mxu0 0
      %1423 = vmatpush1.bf16.msra.mxu0 0
      %1424 = vmatprep.subr.bf16.mxu0 0
      %1425 = vmatpush1.bf16.msra.mxu0 0
      %1426 = vmatprep.subr.bf16.mxu0 0
      %1427 = vmatpush1.bf16.msra.mxu0 0
      %1428 = vmatprep.subr.bf16.mxu0 0
      %1429 = vmatpush1.bf16.msra.mxu0 0
      %1430 = vmatprep.subr.bf16.mxu0 0
      %1431 = vmatpush1.bf16.msra.mxu0 0
      %1432 = vmatprep.subr.bf16.mxu0 0
      %1433 = vmatpush1.bf16.msra.mxu0 0
      %1434 = vmatprep.subr.bf16.mxu0 0
      %1435 = vmatpush1.bf16.msra.mxu0 0
      %1436 = vmatprep.subr.bf16.mxu0 0
      %1437 = vmatpush1.bf16.msra.mxu0 0
      %1438 = vmatprep.subr.bf16.mxu0 0
      %1439 = vmatpush1.bf16.msra.mxu0 0
      %1440 = vmatprep.subr.bf16.mxu0 0
      %1441 = vmatpush1.bf16.msra.mxu0 0
      %1442 = vmatprep.subr.bf16.mxu0 0
      %1443 = vmatpush1.bf16.msra.mxu0 0
      %1444 = vmatprep.mubr.bf16.mxu0 0
      %1445 = vmatmul.mubr.bf16.gmra.mrb[0].mxu0 %v1397
      %v1446 = vpop.f32.mrb[0].mxu0
      %v1447 = vadd.f32 0.0, %v1446
      %v1448 = vpop.f32.mrb[0].mxu0
      %v1449 = vpop.f32.mrb[0].mxu0
      %v1450 = vadd.f32 0.0, %v1449
      %v1451 = vpop.f32.mrb[0].mxu0
      %1452 = vmatprep.mubr.bf16.mxu0 0
      %1453 = vmatmul.mubr.bf16.gmra.mrb[0].mxu0 %v1400
      %v1454 = vpop.f32.mrb[0].mxu0
      %v1455 = vadd.f32 0.0, %v1454
      %v1456 = vpop.f32.mrb[0].mxu0
      %v1457 = vpop.f32.mrb[0].mxu0
      %v1458 = vadd.f32 0.0, %v1457
      %v1459 = vpop.f32.mrb[0].mxu0
      %1460 = vmatprep.mubr.bf16.mxu0 0
      %1461 = vmatmul.mubr.bf16.gmra.mrb[0].mxu0 %v1403
      %v1462 = vpop.f32.mrb[0].mxu0
      %v1463 = vadd.f32 0.0, %v1462
      %v1464 = vpop.f32.mrb[0].mxu0
      %v1465 = vpop.f32.mrb[0].mxu0
      %v1466 = vadd.f32 0.0, %v1465
      %v1467 = vpop.f32.mrb[0].mxu0
      %1468 = vmatprep.mubr.bf16.mxu0 0
      %1469 = vmatmul.mubr.bf16.gmra.mrb[0].mxu0 %v1406
      %v1470 = vpop.f32.mrb[0].mxu0
      %v1471 = vadd.f32 0.0, %v1470
      %v1472 = vpop.f32.mrb[0].mxu0
      %v1473 = vpop.f32.mrb[0].mxu0
      %v1474 = vadd.f32 0.0, %v1473
      %v1475 = vpop.f32.mrb[0].mxu0
      %1476 = vdwg.mxu0
      %v1477 = vadd.f32 %v1336, %v1447
      %v1478 = vadd.f32 %v1339, %v1450
      %v1479 = vadd.f32 %v1344, %v1455
      %v1480 = vadd.f32 %v1347, %v1458
      %v1481 = vadd.f32 %v1352, %v1463
      %v1482 = vadd.f32 %v1355, %v1466
      %v1483 = vadd.f32 %v1360, %v1471
      %v1484 = vadd.f32 %v1363, %v1474
      %v1485 = vmax.f32 %v1477, 0.0
      %v1486 = vmax.f32 %v1478, 0.0
      %v1487 = vmax.f32 %v1479, 0.0
      %v1488 = vmax.f32 %v1480, 0.0
      %v1489 = vmax.f32 %v1481, 0.0
      %v1490 = vmax.f32 %v1482, 0.0
      %v1491 = vmax.f32 %v1483, 0.0
      %v1492 = vmax.f32 %v1484, 0.0
      %1493 = vst.msk [vmem:[%s387] sm:$0xff] %vm1077, %v1485
      %1494 = vst.msk [vmem:[%s387 + $0x8] sm:$0xff] %vm1077, %v1486
      %1495 = vst.msk [vmem:[%s387 + $0x10] sm:$0xff] %vm1077, %v1487
      %1496 = vst.msk [vmem:[%s387 + $0x18] sm:$0xff] %vm1077, %v1488
      %1497 = vst.msk [vmem:[%s387 + $0x20] sm:$0xff] %vm1077, %v1489
      %1498 = vst.msk [vmem:[%s387 + $0x28] sm:$0xff] %vm1077, %v1490
      %1499 = vst.msk [vmem:[%s387 + $0x30] sm:$0xff] %vm1077, %v1491
      %1500 = vst.msk [vmem:[%s387 + $0x38] sm:$0xff] %vm1077, %v1492
      %s1501 = smul.u32 8, %s22
      %p1502 = scmp.lt.s32.totalorder %s21, 1
      %s1503 = scalar_select %p1502, %s21, 1
      %p1504 = scmp.lt.s32.totalorder %s1501, 7
      %s1505 = scalar_select %p1504, %s1501, 7
      %p1506 = scmp.lt.s32.totalorder %s23, 0
      %s1507 = scalar_select %p1506, %s23, 0
      %s1508 = sadd.s32 %s1507, %s1505
      %s1509 = smul.addr %s1503, 8
      %s1510 = sadd.s32 %s1508, %s1509
      %s1511 = smul.addr %s1510, 8
      %s1512 = scalar_lea.vmem %s5, %s1511
      // Predicated region
      $region45: #{basic_block_forward.3} parent=39 // pred_check
        %p1513 = pneg %p193
      $region46: #{basic_block_forward.3} parent=39 // pred_check_branch
        %1515 = sbr.rel (%p1513) target = $region48
      $region47: #{basic_block_forward.3} parent=39 // pred_region
        %s1516 = smul.u32 8, %s22
      $region48: #{basic_block_forward.3} parent=39 // pred_fallthru
        _
    $region40: #{basic_block_forward.3} parent=5 // pred_fallthru
      _
    %p1517 = scmp.le.s32.totalorder 2, %s11
    // Predicated region
    $region49: #{basic_block_forward.3} parent=5 // pred_check
      %p1518 = pneg %p1517
    $region50: #{basic_block_forward.3} parent=5 // pred_check_branch
      %1520 = sbr.rel (%p1518) target = $region52
    $region51: #{basic_block_forward.3} parent=5 // pred_region
      %s1521 = ssub.s32 %s11, 2
      // Predicated region
      $region53: #{basic_block_forward.3} parent=51 // pred_check
        %p1522 = pneg %p199
      $region54: #{basic_block_forward.3} parent=51 // pred_check_branch
        %1524 = sbr.rel (%p1522) target = $region56
      $region55: #{basic_block_forward.3} parent=51 // pred_region
        %s1525 = smul.u32 8, %s25
        %p1526 = scmp.lt.s32.totalorder %s24, 1
        %s1527 = scalar_select %p1526, %s24, 1
        %p1528 = scmp.lt.s32.totalorder %s1525, 7
        %s1529 = scalar_select %p1528, %s1525, 7
        %p1530 = scmp.lt.s32.totalorder %s26, 0
        %s1531 = scalar_select %p1530, %s26, 0
        %s1532 = sadd.s32 %s1531, %s1529
        %s1533 = smul.addr %s1527, 8
        %s1534 = sadd.s32 %s1532, %s1533
        %s1535 = smul.addr %s1534, 8
        %s1536 = scalar_lea.vmem %s5, %s1535
      $region56: #{basic_block_forward.3} parent=51 // pred_fallthru
        _
    $region52: #{basic_block_forward.3} parent=5 // pred_fallthru
      _
  $region6: #{basic_block_forward.3} parent=0 // loop_footer
    %s15 = sadd.s32 1, %s11
  $region7: #{basic_block_forward.3} parent=0 // loop_footer_branch
    %10 = sbr.rel target = $region3
  $region8: #{basic_block_forward.3} parent=0 // loop_exit
    _

</llo_original>
